<compile_context>
chip_gen: v7x
topology: tpu7x:2x2x1
jax: 0.10.0
libtpu: 0.0.40
codegen_flags: <defaults>
</compile_context>

<pallas_src>
import functools
import math

import jax
import jax.numpy as jnp
from jax.experimental import pallas as pl
from jax.experimental.pallas import tpu as pltpu

_EPS = 1e-5


# ----------------------------------------------------------------------------
# Kernel bodies
# ----------------------------------------------------------------------------
def _conv3x3_acc(x_ref, top_ref, bot_ref, w_ref):
    """f32 (TH*W, TC) accumulator of a 3x3 stride-1 'same' conv on one H-strip.

    x_ref:   (1, TH, W, Cin)   strip of the (unpadded) input
    top_ref: (1, 1,  W, Cin)   row above the strip (zeros at the image edge)
    bot_ref: (1, 1,  W, Cin)   row below the strip (zeros at the image edge)
    w_ref:   (3, 3*Cin, TC)    kw-fused conv taps (BN scale already folded in)
    """
    th, wd, cin = x_ref.shape[1], x_ref.shape[2], x_ref.shape[3]
    tc = w_ref.shape[2]
    rows = (th + 2) * wd

    # Strip + one halo row on each side, flattened row-major to (rows, Cin).
    xh = jnp.concatenate([top_ref[0], x_ref[0], bot_ref[0]], axis=0)
    xf = xh.reshape(rows, cin)

    # W-shifted views via XLU rolls.  In the flattened layout a shift of one
    # pixel is a shift of one flat row; elements that wrapped across an image
    # row are exactly the zero W-padding of the convolution, so mask them.
    # Border mask from a plain iota compare (no modulo -> less VALU filler).
    col = jax.lax.broadcasted_iota(jnp.int32, (th + 2, wd, cin), 1)
    col = col.reshape(rows, cin)
    zeros = jnp.zeros_like(xf)
    left = jnp.where(col == 0, zeros,
                     pltpu.roll(xf, shift=1, axis=0))          # x[.., j-1]
    right = jnp.where(col == wd - 1, zeros,
                      pltpu.roll(xf, shift=rows - 1, axis=0))  # x[.., j+1]

    # kw-fused operand: K = 3*Cin per kh tap.
    xcat = jnp.concatenate([left, xf, right], axis=1)          # (rows, 3*Cin)

    # Single accumulator chain; on v7x the MRB accumulates in place.
    acc = jnp.zeros((th * wd, tc), jnp.float32)
    for kh in range(3):                      # short static loop -> unrolled
        lo = kh * wd
        acc = acc + jnp.dot(xcat[lo:lo + th * wd], w_ref[kh],
                            preferred_element_type=jnp.float32)
    return acc


def _conv3x3_bn_kernel(x_ref, top_ref, bot_ref, w_ref, b_ref, o_ref, *, relu):
    """3x3 conv + folded-BN bias (+ optional ReLU)."""
    th, wd = x_ref.shape[1], x_ref.shape[2]
    tc = o_ref.shape[3]
    out = _conv3x3_acc(x_ref, top_ref, bot_ref, w_ref) + b_ref[...]
    if relu:
        out = jnp.maximum(out, 0.0)
    o_ref[0] = out.reshape(th, wd, tc).astype(o_ref.dtype)


def _conv3x3_bn_add_kernel(x_ref, top_ref, bot_ref, w_ref, b_ref, r_ref, o_ref):
    """3x3 conv + folded-BN bias + identity residual + ReLU (fused)."""
    th, wd = x_ref.shape[1], x_ref.shape[2]
    tc = o_ref.shape[3]
    out = _conv3x3_acc(x_ref, top_ref, bot_ref, w_ref) + b_ref[...]
    out = out + r_ref[0].reshape(th * wd, tc).astype(jnp.float32)
    o_ref[0] = jnp.maximum(out, 0.0).reshape(th, wd, tc).astype(o_ref.dtype)


def _conv3x3_bn_proj_kernel(x_ref, top_ref, bot_ref, w_ref, b_ref,
                            xs_ref, wsc_ref, bsc_ref, o_ref):
    """3x3 conv + bias + fused 1x1-projection shortcut (conv+BN) + ReLU."""
    th, wd = x_ref.shape[1], x_ref.shape[2]
    tc = o_ref.shape[3]
    cs = xs_ref.shape[3]
    out = _conv3x3_acc(x_ref, top_ref, bot_ref, w_ref) + b_ref[...]
    xs = xs_ref[0].reshape(th * wd, cs)
    sc = jnp.dot(xs, wsc_ref[...], preferred_element_type=jnp.float32)
    out = out + sc + bsc_ref[...]
    o_ref[0] = jnp.maximum(out, 0.0).reshape(th, wd, tc).astype(o_ref.dtype)


# ----------------------------------------------------------------------------
# Wrapper helpers
# ----------------------------------------------------------------------------
def _vmem_capacity_bytes():
    """Physical VMEM of the current chip (fallback: 64 MiB = v7x floor)."""
    try:
        return int(pltpu.get_tpu_info().vmem_capacity_bytes)
    except Exception:
        return 64 * 1024 * 1024


def _pick_block_c(cout):
    """Cout tile: full Cout when small, else a 128/256 multiple (keeps the
    accumulator bounded and the output block last dim BlockSpec-legal)."""
    if cout > 256 and cout % 256 == 0:
        return 256
    if cout > 256 and cout % 128 == 0:
        return 128
    return cout


def _pick_block_h(H, W, cin, cout, extra_c, dtype, n_batch, budget_bytes):
    """Largest divisor of H whose strip working set fits the per-generation
    VMEM budget.  Counts double-buffered input/output/residual blocks plus the
    in-kernel shifted temporaries and the f32 accumulator.  At batch 1 it
    prefers an even strip count so v7x's two TensorCores both get work."""
    isz = jnp.dtype(dtype).itemsize
    tc = _pick_block_c(cout)
    per_row = W * (
        (2 * cin + 2 * tc + 2 * extra_c) * isz   # 2x-buffered in/out/residual
        + 6 * cin * isz                          # xh, left, right, xcat temps
        + 8 * tc                                 # f32 accumulator + epilogue
    )
    max_th = max(1, min(H, budget_bytes // max(per_row, 1)))
    divs = [d for d in range(1, H + 1) if H % d == 0 and d <= max_th]
    th = max(divs)
    if n_batch == 1:
        even = [d for d in divs if (H // d) % 2 == 0]
        if even and max(even) * 2 >= th:   # never worse than halving the strip
            th = max(even)
    return th


def _halo_rows(x, th):
    """Neighbour rows for every H-strip, shape (N, nH, W, C) each.  Only two
    rows per strip are gathered — no full padded copy of x in HBM."""
    N, H, W, C = x.shape
    z = jnp.zeros((N, 1, W, C), x.dtype)
    top = jnp.concatenate([z, x[:, th - 1:H - 1:th]], axis=1)  # row h*th - 1
    bot = jnp.concatenate([x[:, th:H:th], z], axis=1)          # row (h+1)*th
    return top, bot


def _size(shape, dtype):
    return math.prod(shape) * jnp.dtype(dtype).itemsize


# ----------------------------------------------------------------------------
# Fused conv3x3 (+BN bias) (+residual / projection shortcut) pallas_call
# ----------------------------------------------------------------------------
def conv3x3_bn(x, w_hwio, bias, *, relu=True, block_h=None,
               residual=None, shortcut=None):
    """x: (N,H,W,Cin) NHWC. w_hwio: (3,3,Cin,Cout) with BN scale folded in.
    bias: (Cout,) folded BN bias.

    residual: optional (N,H,W,Cout) identity shortcut, added before the final
              ReLU (ReLU is always applied on the residual variants).
    shortcut: optional (x_orig, w_sc, b_sc) fused 1x1 projection shortcut,
              w_sc: (Cs, Cout) with BN scale folded in, b_sc: (Cout,).
    """
    # TODO(synk): if W is not a multiple of the sublane tile (8 for f32, 16 for
    # bf16) the in-kernel flatten/un-flatten reshapes cost a VMEM relayout;
    # zero-pad W in the wrapper for such shapes.
    N, H, W, Cin = x.shape
    Cout = w_hwio.shape[-1]
    cap = _vmem_capacity_bytes()

    extra_c = 0
    if shortcut is not None:
        extra_c = shortcut[0].shape[-1]
    elif residual is not None:
        extra_c = Cout

    th = block_h if block_h is not None else _pick_block_h(
        H, W, Cin, Cout, extra_c, x.dtype, N, budget_bytes=cap // 4)
    if H % th:
        raise ValueError(f"block_h={th} must divide H={H}")
    nh = H // th
    tc = _pick_block_c(Cout)
    nc = Cout // tc

    top, bot = _halo_rows(x, th)
    # kw-fused weight layout: (3, 3*Cin, Cout); row order is kw-major, which
    # matches the [left, center, right] lane-concat in the kernel.
    w3 = w_hwio.astype(x.dtype).reshape(3, 3 * Cin, Cout)
    b2 = bias.astype(jnp.float32).reshape(1, Cout)

    # Grid: Cout tiles OUTERMOST so the weight/bias block index is constant
    # across the inner (N, H-strip) steps and only DMA'd once per Cout tile.
    x_spec = pl.BlockSpec((1, th, W, Cin), lambda c, n, h: (n, h, 0, 0))
    halo_spec = pl.BlockSpec((1, 1, W, Cin), lambda c, n, h: (n, h, 0, 0))
    w_spec = pl.BlockSpec((3, 3 * Cin, tc), lambda c, n, h: (0, 0, c))
    b_spec = pl.BlockSpec((1, tc), lambda c, n, h: (0, c))
    o_spec = pl.BlockSpec((1, th, W, tc), lambda c, n, h: (n, h, 0, c))

    in_specs = [x_spec, halo_spec, halo_spec, w_spec, b_spec]
    args = [x, top, bot, w3, b2]

    flops = 2 * N * H * W * Cout * 9 * Cin
    bytes_accessed = (_size(x.shape, x.dtype) + _size(w3.shape, w3.dtype)
                      + _size(b2.shape, b2.dtype)
                      + _size((N, H, W, Cout), x.dtype))

    if shortcut is not None:
        xs, wsc, bsc = shortcut
        cs = xs.shape[-1]
        kernel = _conv3x3_bn_proj_kernel
        in_specs += [pl.BlockSpec((1, th, W, cs), lambda c, n, h: (n, h, 0, 0)),
                     pl.BlockSpec((cs, tc), lambda c, n, h: (0, c)),
                     pl.BlockSpec((1, tc), lambda c, n, h: (0, c))]
        args += [xs, wsc.astype(x.dtype).reshape(cs, Cout),
                 bsc.astype(jnp.float32).reshape(1, Cout)]
        flops += 2 * N * H * W * Cout * cs
        bytes_accessed += _size(xs.shape, xs.dtype) + _size((cs, Cout), x.dtype)
    elif residual is not None:
        kernel = _conv3x3_bn_add_kernel
        in_specs += [pl.BlockSpec((1, th, W, tc),
                                  lambda c, n, h: (n, h, 0, c))]
        args += [residual]
        bytes_accessed += _size(residual.shape, residual.dtype)
    else:
        kernel = functools.partial(_conv3x3_bn_kernel, relu=relu)

    return pl.pallas_call(
        kernel,
        out_shape=jax.ShapeDtypeStruct((N, H, W, Cout), x.dtype),
        grid_spec=pltpu.PrefetchScalarGridSpec(
            num_scalar_prefetch=0,
            grid=(nc, N, nh),
            in_specs=in_specs,
            out_specs=o_spec),
        compiler_params=pltpu.CompilerParams(
            dimension_semantics=("parallel", "parallel", "parallel"),
            vmem_limit_bytes=max(32 * 1024 * 1024, (cap * 3) // 4)),
        cost_estimate=pl.CostEstimate(flops=flops, transcendentals=0,
                                      bytes_accessed=bytes_accessed),
    )(*args)


# ----------------------------------------------------------------------------
# BasicBlock forward
# ----------------------------------------------------------------------------
def _fold_bn(bn):
    gamma, beta, mean, var = bn
    scale = gamma / jnp.sqrt(var + _EPS)
    return scale, beta - mean * scale


def basic_block_forward(x_nchw, params, *, block_h=None):
    """BasicBlock.forward (inference BN).  Input/output NCHW like PyTorch."""
    # TODO(synk): stride > 1 path of the module is not implemented (default
    # stride=1 is); the projection shortcut for in_channels != out_channels is.
    x = jnp.transpose(x_nchw, (0, 2, 3, 1))          # NCHW -> NHWC
    s1, b1 = _fold_bn(params["bn1"])
    s2, b2 = _fold_bn(params["bn2"])
    w1 = params["w1"] * s1                           # fold BN scale into weights
    w2 = params["w2"] * s2

    out = conv3x3_bn(x, w1, b1, relu=True, block_h=block_h)       # conv1+bn1+relu
    if "w_sc" in params:
        ssc, bsc = _fold_bn(params["bn_sc"])
        wsc = (params["w_sc"] * ssc)[0, 0]                        # (Cin, Cout)
        out = conv3x3_bn(out, w2, b2, block_h=block_h,
                         shortcut=(x, wsc, bsc))                  # conv2+bn2+proj+relu
    else:
        out = conv3x3_bn(out, w2, b2, block_h=block_h,
                         residual=x)                              # conv2+bn2+add+relu
    return jnp.transpose(out, (0, 3, 1, 2))          # NHWC -> NCHW


# ----------------------------------------------------------------------------
# Pure-JAX reference (correctness check)
# ----------------------------------------------------------------------------
def _reference_forward(x_nchw, params):
    x = jnp.transpose(x_nchw, (0, 2, 3, 1))

    def conv(h, w, pad):
        return jax.lax.conv_general_dilated(
            h, w, (1, 1), [(pad, pad), (pad, pad)],
            dimension_numbers=("NHWC", "HWIO", "NHWC"))

    def bn(h, p):
        g, b, m, v = p
        return (h - m) / jnp.sqrt(v + _EPS) * g + b

    out = jax.nn.relu(bn(conv(x, params["w1"], 1), params["bn1"]))
    out = bn(conv(out, params["w2"], 1), params["bn2"])
    sc = x
    if "w_sc" in params:
        sc = bn(conv(x, params["w_sc"], 0), params["bn_sc"])
    out = jax.nn.relu(out + sc)
    return jnp.transpose(out, (0, 3, 1, 2))


# ----------------------------------------------------------------------------
if __name__ == "__main__":
    key = jax.random.PRNGKey(0)
    N, Cin, Cout, H, W = 2, 4, 8, 16, 16
    keys = jax.random.split(key, 12)

    def bn_params(k, C):
        k1, k2, k3, k4 = jax.random.split(k, 4)
        gamma = 1.0 + 0.1 * jax.random.normal(k1, (C,), jnp.float32)
        beta = 0.1 * jax.random.normal(k2, (C,), jnp.float32)
        mean = 0.1 * jax.random.normal(k3, (C,), jnp.float32)
        var = 1.0 + 0.1 * jnp.abs(jax.random.normal(k4, (C,), jnp.float32))
        return (gamma, beta, mean, var)

    # Case 1: in_channels != out_channels -> fused 1x1 projection shortcut.
    # block_h=8 forces 2 H-strips so the halo path is exercised.
    x = jax.random.normal(keys[0], (N, Cin, H, W), jnp.float32)
    params = {
        "w1": 0.1 * jax.random.normal(keys[1], (3, 3, Cin, Cout), jnp.float32),
        "bn1": bn_params(keys[2], Cout),
        "w2": 0.1 * jax.random.normal(keys[3], (3, 3, Cout, Cout), jnp.float32),
        "bn2": bn_params(keys[4], Cout),
        "w_sc": 0.1 * jax.random.normal(keys[5], (1, 1, Cin, Cout), jnp.float32),
        "bn_sc": bn_params(keys[6], Cout),
    }
    out = basic_block_forward(x, params, block_h=8)
    jax.block_until_ready(out)
    err = float(jnp.max(jnp.abs(out - _reference_forward(x, params))))
    if err > 1e-3:
        raise AssertionError(f"projection-shortcut mismatch vs reference: {err}")

    # Case 2: in_channels == out_channels -> fused identity shortcut,
    # auto-picked strip height (exercises the VMEM-budget picker).
    x2 = jax.random.normal(keys[7], (N, Cout, H, W), jnp.float32)
    params_id = {
        "w1": 0.1 * jax.random.normal(keys[8], (3, 3, Cout, Cout), jnp.float32),
        "bn1": bn_params(keys[9], Cout),
        "w2": 0.1 * jax.random.normal(keys[10], (3, 3, Cout, Cout), jnp.float32),
        "bn2": bn_params(keys[11], Cout),
    }
    out2 = basic_block_forward(x2, params_id, block_h=None)
    jax.block_until_ready(out2)
    err2 = float(jnp.max(jnp.abs(out2 - _reference_forward(x2, params_id))))
    if err2 > 1e-3:
        raise AssertionError(f"identity-shortcut mismatch vs reference: {err2}")

    print("KERNEL_OK")
</pallas_src>

<mosaic_0001>
module attributes {stable_mosaic.version = 11 : i64} {
  func.func @_conv3x3_bn_kernel(%arg0: i32, %arg1: i32, %arg2: i32, %arg3: memref<1x8x16x4xf32, #tpu.memory_space<vmem>>, %arg4: memref<1x1x16x4xf32, #tpu.memory_space<vmem>>, %arg5: memref<1x1x16x4xf32, #tpu.memory_space<vmem>>, %arg6: memref<3x12x8xf32, #tpu.memory_space<vmem>>, %arg7: memref<1x8xf32, #tpu.memory_space<vmem>>, %arg8: memref<1x8x16x8xf32, #tpu.memory_space<vmem>>) attributes {dimension_semantics = [#tpu.dimension_semantics<parallel>, #tpu.dimension_semantics<parallel>, #tpu.dimension_semantics<parallel>], iteration_bounds = array<i64: 1, 2, 2>, scalar_prefetch = 0 : i64, scratch_operands = 0 : i64, tpu.core_type = #tpu.core_type<tc>, window_params = [{transform_indices = @transform_0, window_bounds = array<i64: 1, 8, 16, 4>}, {transform_indices = @transform_1, window_bounds = array<i64: 1, 1, 16, 4>}, {transform_indices = @transform_2, window_bounds = array<i64: 1, 1, 16, 4>}, {transform_indices = @transform_3, window_bounds = array<i64: 3, 12, 8>}, {transform_indices = @transform_4, window_bounds = array<i64: 1, 8>}, {transform_indices = @transform_5, window_bounds = array<i64: 1, 8, 16, 8>}]} {
    %c0 = arith.constant 0 : index
    %c0_0 = arith.constant 0 : index
    %c0_1 = arith.constant 0 : index
    %c0_2 = arith.constant 0 : index
    %0 = vector.load %arg4[%c0, %c0_0, %c0_1, %c0_2] : memref<1x1x16x4xf32, #tpu.memory_space<vmem>>, vector<1x1x16x4xf32>
    %1 = vector.shape_cast %0 : vector<1x1x16x4xf32> to vector<1x16x4xf32>
    %c0_3 = arith.constant 0 : index
    %c0_4 = arith.constant 0 : index
    %c0_5 = arith.constant 0 : index
    %c0_6 = arith.constant 0 : index
    %2 = vector.load %arg3[%c0_3, %c0_4, %c0_5, %c0_6] : memref<1x8x16x4xf32, #tpu.memory_space<vmem>>, vector<1x8x16x4xf32>
    %3 = vector.shape_cast %2 : vector<1x8x16x4xf32> to vector<8x16x4xf32>
    %c0_7 = arith.constant 0 : index
    %c0_8 = arith.constant 0 : index
    %c0_9 = arith.constant 0 : index
    %c0_10 = arith.constant 0 : index
    %4 = vector.load %arg5[%c0_7, %c0_8, %c0_9, %c0_10] : memref<1x1x16x4xf32, #tpu.memory_space<vmem>>, vector<1x1x16x4xf32>
    %5 = vector.shape_cast %4 : vector<1x1x16x4xf32> to vector<1x16x4xf32>
    %6 = tpu.concatenate %1, %3, %5 in 0 : vector<1x16x4xf32>, vector<8x16x4xf32>, vector<1x16x4xf32> -> vector<10x16x4xf32>
    %7 = vector.shape_cast %6 : vector<10x16x4xf32> to vector<160x4xf32>
    %8 = tpu.iota {dimensions = array<i32: 1>} : vector<10x16x4xi32>
    %9 = vector.shape_cast %8 : vector<10x16x4xi32> to vector<160x4xi32>
    %cst = arith.constant 0.000000e+00 : f32
    %10 = vector.broadcast %cst : f32 to vector<160x4xf32>
    %c0_i32 = arith.constant 0 : i32
    %11 = vector.broadcast %c0_i32 : i32 to vector<160x4xi32>
    %12 = arith.cmpi eq, %9, %11 : vector<160x4xi32>
    %c1_i32 = arith.constant 1 : i32
    %13 = tpu.dynamic_rotate %7 by %c1_i32 dim 0 : vector<160x4xf32>, i32 -> vector<160x4xf32>
    %14 = arith.select %12, %10, %13 : vector<160x4xi1>, vector<160x4xf32>
    %c15_i32 = arith.constant 15 : i32
    %15 = vector.broadcast %c15_i32 : i32 to vector<160x4xi32>
    %16 = arith.cmpi eq, %9, %15 : vector<160x4xi32>
    %c159_i32 = arith.constant 159 : i32
    %17 = tpu.dynamic_rotate %7 by %c159_i32 dim 0 : vector<160x4xf32>, i32 -> vector<160x4xf32>
    %18 = arith.select %16, %10, %17 : vector<160x4xi1>, vector<160x4xf32>
    %19 = tpu.concatenate %14, %7, %18 in 1 : vector<160x4xf32>, vector<160x4xf32>, vector<160x4xf32> -> vector<160x12xf32>
    %cst_11 = arith.constant 0.000000e+00 : f32
    %20 = vector.broadcast %cst_11 : f32 to vector<128x8xf32>
    %21 = vector.extract_strided_slice %19 {offsets = [0, 0], sizes = [128, 12], strides = [1, 1]} : vector<160x12xf32> to vector<128x12xf32>
    %c0_12 = arith.constant 0 : index
    %c0_13 = arith.constant 0 : index
    %c0_14 = arith.constant 0 : index
    %22 = vector.load %arg6[%c0_12, %c0_13, %c0_14] : memref<3x12x8xf32, #tpu.memory_space<vmem>>, vector<1x12x8xf32>
    %23 = vector.shape_cast %22 : vector<1x12x8xf32> to vector<12x8xf32>
    %cst_15 = arith.constant dense<0.000000e+00> : vector<128x8xf32>
    %24 = tpu.matmul %21, %23, %cst_15 {dimension_numbers = #tpu.dot_dimension_numbers<[1], [0], [0], [1], [0, 0, 1, 1], [], []>} : vector<128x12xf32>, vector<12x8xf32>, vector<128x8xf32> -> vector<128x8xf32>
    %25 = arith.addf %20, %24 : vector<128x8xf32>
    %26 = vector.extract_strided_slice %19 {offsets = [16, 0], sizes = [128, 12], strides = [1, 1]} : vector<160x12xf32> to vector<128x12xf32>
    %c1 = arith.constant 1 : index
    %c0_16 = arith.constant 0 : index
    %c0_17 = arith.constant 0 : index
    %27 = vector.load %arg6[%c1, %c0_16, %c0_17] : memref<3x12x8xf32, #tpu.memory_space<vmem>>, vector<1x12x8xf32>
    %28 = vector.shape_cast %27 : vector<1x12x8xf32> to vector<12x8xf32>
    %cst_18 = arith.constant dense<0.000000e+00> : vector<128x8xf32>
    %29 = tpu.matmul %26, %28, %cst_18 {dimension_numbers = #tpu.dot_dimension_numbers<[1], [0], [0], [1], [0, 0, 1, 1], [], []>} : vector<128x12xf32>, vector<12x8xf32>, vector<128x8xf32> -> vector<128x8xf32>
    %30 = arith.addf %25, %29 : vector<128x8xf32>
    %31 = vector.extract_strided_slice %19 {offsets = [32, 0], sizes = [128, 12], strides = [1, 1]} : vector<160x12xf32> to vector<128x12xf32>
    %c2 = arith.constant 2 : index
    %c0_19 = arith.constant 0 : index
    %c0_20 = arith.constant 0 : index
    %32 = vector.load %arg6[%c2, %c0_19, %c0_20] : memref<3x12x8xf32, #tpu.memory_space<vmem>>, vector<1x12x8xf32>
    %33 = vector.shape_cast %32 : vector<1x12x8xf32> to vector<12x8xf32>
    %cst_21 = arith.constant dense<0.000000e+00> : vector<128x8xf32>
    %34 = tpu.matmul %31, %33, %cst_21 {dimension_numbers = #tpu.dot_dimension_numbers<[1], [0], [0], [1], [0, 0, 1, 1], [], []>} : vector<128x12xf32>, vector<12x8xf32>, vector<128x8xf32> -> vector<128x8xf32>
    %35 = arith.addf %30, %34 : vector<128x8xf32>
    %c0_22 = arith.constant 0 : index
    %c0_23 = arith.constant 0 : index
    %36 = vector.load %arg7[%c0_22, %c0_23] : memref<1x8xf32, #tpu.memory_space<vmem>>, vector<1x8xf32>
    %37 = vector.broadcast %36 : vector<1x8xf32> to vector<128x8xf32>
    %38 = arith.addf %35, %37 : vector<128x8xf32>
    %cst_24 = arith.constant 0.000000e+00 : f32
    %39 = vector.broadcast %cst_24 : f32 to vector<128x8xf32>
    %40 = arith.maximumf %38, %39 : vector<128x8xf32>
    %41 = vector.shape_cast %40 : vector<128x8xf32> to vector<8x16x8xf32>
    %c0_25 = arith.constant 0 : index
    %c0_26 = arith.constant 0 : index
    %c0_27 = arith.constant 0 : index
    %c0_28 = arith.constant 0 : index
    %42 = vector.load %arg8[%c0_25, %c0_26, %c0_27, %c0_28] : memref<1x8x16x8xf32, #tpu.memory_space<vmem>>, vector<1x8x16x8xf32>
    %43 = vector.shape_cast %42 : vector<1x8x16x8xf32> to vector<8x16x8xf32>
    %44 = vector.shape_cast %41 : vector<8x16x8xf32> to vector<1x8x16x8xf32>
    tpu.vector_store %arg8[%c0_25, %c0_26, %c0_27, %c0_28], %44 {strides = array<i32>} : memref<1x8x16x8xf32, #tpu.memory_space<vmem>>, vector<1x8x16x8xf32>,
    return
  }
  func.func @transform_0(%arg0: i32, %arg1: i32, %arg2: i32) -> (i32, i32, i32, i32) {
    %c0_i32 = arith.constant 0 : i32
    %c0_i32_0 = arith.constant 0 : i32
    %c0_i32_1 = arith.constant 0 : i32
    return %arg1, %arg2, %c0_i32, %c0_i32_0 : i32, i32, i32, i32
  }
  func.func @transform_1(%arg0: i32, %arg1: i32, %arg2: i32) -> (i32, i32, i32, i32) {
    %c0_i32 = arith.constant 0 : i32
    %c0_i32_0 = arith.constant 0 : i32
    %c0_i32_1 = arith.constant 0 : i32
    return %arg1, %arg2, %c0_i32, %c0_i32_0 : i32, i32, i32, i32
  }
  func.func @transform_2(%arg0: i32, %arg1: i32, %arg2: i32) -> (i32, i32, i32, i32) {
    %c0_i32 = arith.constant 0 : i32
    %c0_i32_0 = arith.constant 0 : i32
    %c0_i32_1 = arith.constant 0 : i32
    return %arg1, %arg2, %c0_i32, %c0_i32_0 : i32, i32, i32, i32
  }
  func.func @transform_3(%arg0: i32, %arg1: i32, %arg2: i32) -> (i32, i32, i32) {
    %c0_i32 = arith.constant 0 : i32
    %c0_i32_0 = arith.constant 0 : i32
    %c0_i32_1 = arith.constant 0 : i32
    return %c0_i32, %c0_i32_0, %arg0 : i32, i32, i32
  }
  func.func @transform_4(%arg0: i32, %arg1: i32, %arg2: i32) -> (i32, i32) {
    %c0_i32 = arith.constant 0 : i32
    %c0_i32_0 = arith.constant 0 : i32
    return %c0_i32, %arg0 : i32, i32
  }
  func.func @transform_5(%arg0: i32, %arg1: i32, %arg2: i32) -> (i32, i32, i32, i32) {
    %c0_i32 = arith.constant 0 : i32
    %c0_i32_0 = arith.constant 0 : i32
    return %arg1, %arg2, %c0_i32, %arg0 : i32, i32, i32, i32
  }
}

</mosaic_0001>

<llo_original>
// kernel: tpu_custom_call.1
$region0: #{tpu_custom_call.1}
  #allocation0 [shape = 'u32[]', space=smem, size = 0x4, offset = 0x4, fixed_abs, tag = 'smem constant byte address 0x4 - core index']
  #allocation1 [shape = 'u32[144,128]{1,0:T(1,128)}', space=vmem, size = 0x12000, scoped, tag = 'internal scratch']
  %s0 = inlined_call_operand.vmem [shape: f32[2,16,16,4], index: 0, kind: input, shape index: {}]
  %s1 = inlined_call_operand.vmem [shape: f32[2,2,16,4], index: 1, kind: input, shape index: {}]
  %s2 = inlined_call_operand.vmem [shape: f32[2,2,16,4], index: 2, kind: input, shape index: {}]
  %s3 = inlined_call_operand.vmem [shape: f32[3,12,8], index: 3, kind: input, shape index: {}]
  %s4 = inlined_call_operand.vmem [shape: f32[1,8], index: 4, kind: input, shape index: {}]
  %s5 = inlined_call_operand.vmem [shape: f32[2,16,16,8], index: 5, kind: output, shape index: {}]
  %s6 = sld [smem:[#allocation0]]
  $region53: #{tpu_custom_call.1} parent=0
    _
  %s8 = ssub.s32 1, %s6
  %s9 = scalar_select 0, %s8, %s6
  loop: start=0, step=1, limit=6
  $region2: #{tpu_custom_call.1} parent=0 // loop_pre_header
    _
  $region3: #{tpu_custom_call.1} parent=0 // loop_header
    %s11 = sphi 0, %s15
    %p12 = scmp.ge.s32.totalorder %s11, 6
    %s18 = sphi 0, %s37
    %s19 = sphi 0, %s33
    %s20 = sphi 0, %s29
    %s21 = sphi 0, %s18
    %s22 = sphi 0, %s19
    %s23 = sphi 0, %s20
    %s24 = sphi 0, %s21
    %s25 = sphi 0, %s22
    %s26 = sphi 0, %s23
    %s42 = sphi 0, %s44
    %s45 = sphi 0, %s42
    %s46 = sphi 0, %s45
    %s62 = sphi 0, %s46
    %s70 = sphi 0, %s72
    %s73 = sphi 0, %s70
    %s74 = sphi 0, %s73
    %s90 = sphi 0, %s74
    %s98 = sphi 0, %s100
    %s101 = sphi 0, %s98
    %s102 = sphi 0, %s101
    %s118 = sphi 0, %s102
    %s124 = sphi 0, %s126
    %s127 = sphi 0, %s124
    %s128 = sphi 0, %s127
    %s144 = sphi 0, %s128
    %s150 = sphi 0, %s152
    %s153 = sphi 0, %s150
    %s154 = sphi 0, %s153
    %s170 = sphi 0, %s154
    %s180 = sphi 0, %s182
    %s183 = sphi 0, %s180
    %s184 = sphi 0, %s183
    %s200 = sphi 0, %s184
  $region4: #{tpu_custom_call.1} parent=0 // loop_header_branch
    %14 = sbr.rel (%p12) target = $region8
  $region5: #{tpu_custom_call.1} parent=0 // loop_body
    %s16 = ssub.s32 %s11, 1
    %s17 = ssub.s32 %s11, 2
    %s27 = sadd.s32 1, %s20
    %p28 = scmp.ge.s32.totalorder %s27, 2
    %s29 = scalar_select %p28, 0, %s27
    %s30 = sadd.s32 1, %s19
    %s31 = scalar_select %p28, %s30, %s19
    %p32 = scmp.ge.s32.totalorder %s31, 2
    %s33 = scalar_select %p32, 0, %s31
    %s34 = sadd.s32 1, %s18
    %s35 = scalar_select %p32, %s34, %s18
    %p36 = scmp.ge.s32.totalorder %s35, 1
    %s37 = scalar_select %p36, 0, %s35
    %s38 = ssub.s32 %s19, %s33
    %s39 = ssub.s32 %s20, %s29
    %s40 = sor.u32 %s38, %s39
    %p41 = scmp.eq.s32.totalorder %s40, 0
    %s43 = sadd.s32 %s42, 1
    %s44 = scalar_select %p41, %s42, %s43
    %p47 = pneg %p41
    %p48 = scmp.eq.s32.totalorder %s11, 3
    %p49 = por %p47, %p48
    %p50 = scmp.ne.s32.totalorder %s42, %s45
    %p51 = scmp.eq.s32.totalorder %s11, 0
    %p52 = por %p50, %p51
    %p53 = scmp.ne.s32.totalorder %s42, %s45
    %p54 = scmp.eq.s32.totalorder %s16, 3
    %p55 = por %p53, %p54
    %p56 = scmp.ne.s32.totalorder %s45, %s46
    %p57 = scmp.eq.s32.totalorder %s16, 0
    %p58 = por %p56, %p57
    %p59 = scmp.ne.s32.totalorder %s45, %s46
    %p60 = scmp.eq.s32.totalorder %s17, 3
    %p61 = por %p59, %p60
    %p63 = scmp.ne.s32.totalorder %s46, %s62
    %p64 = scmp.eq.s32.totalorder %s17, 0
    %p65 = por %p63, %p64
    %s66 = ssub.s32 %s19, %s33
    %s67 = ssub.s32 %s20, %s29
    %s68 = sor.u32 %s66, %s67
    %p69 = scmp.eq.s32.totalorder %s68, 0
    %s71 = sadd.s32 %s70, 1
    %s72 = scalar_select %p69, %s70, %s71
    %p75 = pneg %p69
    %p76 = scmp.eq.s32.totalorder %s11, 3
    %p77 = por %p75, %p76
    %p78 = scmp.ne.s32.totalorder %s70, %s73
    %p79 = scmp.eq.s32.totalorder %s11, 0
    %p80 = por %p78, %p79
    %p81 = scmp.ne.s32.totalorder %s70, %s73
    %p82 = scmp.eq.s32.totalorder %s16, 3
    %p83 = por %p81, %p82
    %p84 = scmp.ne.s32.totalorder %s73, %s74
    %p85 = scmp.eq.s32.totalorder %s16, 0
    %p86 = por %p84, %p85
    %p87 = scmp.ne.s32.totalorder %s73, %s74
    %p88 = scmp.eq.s32.totalorder %s17, 3
    %p89 = por %p87, %p88
    %p91 = scmp.ne.s32.totalorder %s74, %s90
    %p92 = scmp.eq.s32.totalorder %s17, 0
    %p93 = por %p91, %p92
    %s94 = ssub.s32 %s19, %s33
    %s95 = ssub.s32 %s20, %s29
    %s96 = sor.u32 %s94, %s95
    %p97 = scmp.eq.s32.totalorder %s96, 0
    %s99 = sadd.s32 %s98, 1
    %s100 = scalar_select %p97, %s98, %s99
    %p103 = pneg %p97
    %p104 = scmp.eq.s32.totalorder %s11, 3
    %p105 = por %p103, %p104
    %p106 = scmp.ne.s32.totalorder %s98, %s101
    %p107 = scmp.eq.s32.totalorder %s11, 0
    %p108 = por %p106, %p107
    %p109 = scmp.ne.s32.totalorder %s98, %s101
    %p110 = scmp.eq.s32.totalorder %s16, 3
    %p111 = por %p109, %p110
    %p112 = scmp.ne.s32.totalorder %s101, %s102
    %p113 = scmp.eq.s32.totalorder %s16, 0
    %p114 = por %p112, %p113
    %p115 = scmp.ne.s32.totalorder %s101, %s102
    %p116 = scmp.eq.s32.totalorder %s17, 3
    %p117 = por %p115, %p116
    %p119 = scmp.ne.s32.totalorder %s102, %s118
    %p120 = scmp.eq.s32.totalorder %s17, 0
    %p121 = por %p119, %p120
    %s122 = ssub.s32 %s18, %s37
    %p123 = scmp.eq.s32.totalorder %s122, 0
    %s125 = sadd.s32 %s124, 1
    %s126 = scalar_select %p123, %s124, %s125
    %p129 = pneg %p123
    %p130 = scmp.eq.s32.totalorder %s11, 3
    %p131 = por %p129, %p130
    %p132 = scmp.ne.s32.totalorder %s124, %s127
    %p133 = scmp.eq.s32.totalorder %s11, 0
    %p134 = por %p132, %p133
    %p135 = scmp.ne.s32.totalorder %s124, %s127
    %p136 = scmp.eq.s32.totalorder %s16, 3
    %p137 = por %p135, %p136
    %p138 = scmp.ne.s32.totalorder %s127, %s128
    %p139 = scmp.eq.s32.totalorder %s16, 0
    %p140 = por %p138, %p139
    %p141 = scmp.ne.s32.totalorder %s127, %s128
    %p142 = scmp.eq.s32.totalorder %s17, 3
    %p143 = por %p141, %p142
    %p145 = scmp.ne.s32.totalorder %s128, %s144
    %p146 = scmp.eq.s32.totalorder %s17, 0
    %p147 = por %p145, %p146
    %s148 = ssub.s32 %s18, %s37
    %p149 = scmp.eq.s32.totalorder %s148, 0
    %s151 = sadd.s32 %s150, 1
    %s152 = scalar_select %p149, %s150, %s151
    %p155 = pneg %p149
    %p156 = scmp.eq.s32.totalorder %s11, 3
    %p157 = por %p155, %p156
    %p158 = scmp.ne.s32.totalorder %s150, %s153
    %p159 = scmp.eq.s32.totalorder %s11, 0
    %p160 = por %p158, %p159
    %p161 = scmp.ne.s32.totalorder %s150, %s153
    %p162 = scmp.eq.s32.totalorder %s16, 3
    %p163 = por %p161, %p162
    %p164 = scmp.ne.s32.totalorder %s153, %s154
    %p165 = scmp.eq.s32.totalorder %s16, 0
    %p166 = por %p164, %p165
    %p167 = scmp.ne.s32.totalorder %s153, %s154
    %p168 = scmp.eq.s32.totalorder %s17, 3
    %p169 = por %p167, %p168
    %p171 = scmp.ne.s32.totalorder %s154, %s170
    %p172 = scmp.eq.s32.totalorder %s17, 0
    %p173 = por %p171, %p172
    %s174 = ssub.s32 %s19, %s33
    %s175 = ssub.s32 %s20, %s29
    %s176 = sor.u32 %s174, %s175
    %s177 = ssub.s32 %s18, %s37
    %s178 = sor.u32 %s176, %s177
    %p179 = scmp.eq.s32.totalorder %s178, 0
    %s181 = sadd.s32 %s180, 1
    %s182 = scalar_select %p179, %s180, %s181
    %p185 = pneg %p179
    %p186 = scmp.eq.s32.totalorder %s11, 3
    %p187 = por %p185, %p186
    %p188 = scmp.ne.s32.totalorder %s180, %s183
    %p189 = scmp.eq.s32.totalorder %s11, 0
    %p190 = por %p188, %p189
    %p191 = scmp.ne.s32.totalorder %s180, %s183
    %p192 = scmp.eq.s32.totalorder %s16, 3
    %p193 = por %p191, %p192
    %p194 = scmp.ne.s32.totalorder %s183, %s184
    %p195 = scmp.eq.s32.totalorder %s16, 0
    %p196 = por %p194, %p195
    %p197 = scmp.ne.s32.totalorder %s183, %s184
    %p198 = scmp.eq.s32.totalorder %s17, 3
    %p199 = por %p197, %p198
    %p201 = scmp.ne.s32.totalorder %s184, %s200
    %p202 = scmp.eq.s32.totalorder %s17, 0
    %p203 = por %p201, %p202
    %p204 = scmp.le.s32.totalorder 1, %s11
    %p205 = scmp.lt.s32.totalorder %s11, 5
    %p206 = pnand %p204, %p205
    %p207 = pneg %p206
    // Predicated region
    $region9: #{tpu_custom_call.1} parent=5 // pred_check
      _
    $region10: #{tpu_custom_call.1} parent=5 // pred_check_branch
      %209 = sbr.rel (%p206) target = $region12
    $region11: #{tpu_custom_call.1} parent=5 // pred_region
      %s210 = ssub.s32 %s11, 1
      // Predicated region
      $region13: #{tpu_custom_call.1} parent=11 // pred_check
        %p211 = pneg %p140
      $region14: #{tpu_custom_call.1} parent=11 // pred_check_branch
        %213 = sbr.rel (%p211) target = $region16
      $region15: #{tpu_custom_call.1} parent=11 // pred_region
        %p214 = scmp.lt.s32.totalorder %s21, 0
        %s215 = scalar_select %p214, %s21, 0
        %s216 = smul.addr %s215, 8
        %s217 = scalar_lea.vmem %s3, %s216
      $region16: #{tpu_custom_call.1} parent=11 // pred_fallthru
        _
      // Predicated region
      $region17: #{tpu_custom_call.1} parent=11 // pred_check
        %p218 = pneg %p166
      $region18: #{tpu_custom_call.1} parent=11 // pred_check_branch
        %220 = sbr.rel (%p218) target = $region20
      $region19: #{tpu_custom_call.1} parent=11 // pred_region
        %p221 = scmp.lt.s32.totalorder %s21, 0
        %s222 = scalar_select %p221, %s21, 0
        %s223 = scalar_lea.vmem %s4, %s222
      $region20: #{tpu_custom_call.1} parent=11 // pred_fallthru
        _
    $region12: #{tpu_custom_call.1} parent=5 // pred_fallthru
      _
    %p224 = scmp.lt.s32.totalorder %s11, 4
    // Predicated region
    $region21: #{tpu_custom_call.1} parent=5 // pred_check
      %p225 = pneg %p224
    $region22: #{tpu_custom_call.1} parent=5 // pred_check_branch
      %227 = sbr.rel (%p225) target = $region24
    $region23: #{tpu_custom_call.1} parent=5 // pred_region
      // Predicated region
      $region25: #{tpu_custom_call.1} parent=23 // pred_check
        %p228 = pneg %p52
      $region26: #{tpu_custom_call.1} parent=23 // pred_check_branch
        %230 = sbr.rel (%p228) target = $region28
      $region27: #{tpu_custom_call.1} parent=23 // pred_region
        %s231 = smul.u32 8, %s20
        %p232 = scmp.lt.s32.totalorder %s19, 1
        %s233 = scalar_select %p232, %s19, 1
        %p234 = scmp.lt.s32.totalorder %s231, 15
        %s235 = scalar_select %p234, %s231, 15
        %s236 = smul.addr %s235, 2
        %s237 = smul.addr %s233, 32
        %s238 = sadd.s32 %s236, %s237
        %s239 = smul.addr %s238, 8
        %s240 = scalar_lea.vmem %s0, %s239
        %s241 = smul.u32 8, %s20
      $region28: #{tpu_custom_call.1} parent=23 // pred_fallthru
        _
      // Predicated region
      $region29: #{tpu_custom_call.1} parent=23 // pred_check
        %p242 = pneg %p80
      $region30: #{tpu_custom_call.1} parent=23 // pred_check_branch
        %244 = sbr.rel (%p242) target = $region32
      $region31: #{tpu_custom_call.1} parent=23 // pred_region
        %p245 = scmp.lt.s32.totalorder %s19, 1
        %s246 = scalar_select %p245, %s19, 1
        %p247 = scmp.lt.s32.totalorder %s20, 1
        %s248 = scalar_select %p247, %s20, 1
        %s249 = smul.addr %s248, 2
        %s250 = smul.addr %s246, 4
        %s251 = sadd.s32 %s249, %s250
        %s252 = smul.addr %s251, 8
        %s253 = scalar_lea.vmem %s1, %s252
      $region32: #{tpu_custom_call.1} parent=23 // pred_fallthru
        _
      // Predicated region
      $region33: #{tpu_custom_call.1} parent=23 // pred_check
        %p254 = pneg %p108
      $region34: #{tpu_custom_call.1} parent=23 // pred_check_branch
        %256 = sbr.rel (%p254) target = $region36
      $region35: #{tpu_custom_call.1} parent=23 // pred_region
        %p257 = scmp.lt.s32.totalorder %s19, 1
        %s258 = scalar_select %p257, %s19, 1
        %p259 = scmp.lt.s32.totalorder %s20, 1
        %s260 = scalar_select %p259, %s20, 1
        %s261 = smul.addr %s260, 2
        %s262 = smul.addr %s258, 4
        %s263 = sadd.s32 %s261, %s262
        %s264 = smul.addr %s263, 8
        %s265 = scalar_lea.vmem %s2, %s264
      $region36: #{tpu_custom_call.1} parent=23 // pred_fallthru
        _
    $region24: #{tpu_custom_call.1} parent=5 // pred_fallthru
      _
    %p266 = scmp.le.s32.totalorder 1, %s11
    %p267 = scmp.lt.s32.totalorder %s11, 5
    %p268 = pnand %p266, %p267
    %p269 = pneg %p268
    // Predicated region
    $region37: #{tpu_custom_call.1} parent=5 // pred_check
      _
    $region38: #{tpu_custom_call.1} parent=5 // pred_check_branch
      %271 = sbr.rel (%p268) target = $region40
    $region39: #{tpu_custom_call.1} parent=5 // pred_region
      %s272 = ssub.s32 %s11, 1
      %s273 = smul.u32 8, %s23
      %p274 = scmp.lt.s32.totalorder %s22, 1
      %s275 = scalar_select %p274, %s22, 1
      %p276 = scmp.lt.s32.totalorder %s273, 15
      %s277 = scalar_select %p276, %s273, 15
      %s278 = smul.addr %s277, 2
      %s279 = smul.addr %s275, 32
      %s280 = sadd.s32 %s278, %s279
      %s281 = smul.addr %s280, 8
      %s282 = scalar_lea.vmem %s0, %s281
      %p283 = pneg %p58
      %p284 = pneg %p55
      %p285 = scmp.lt.s32.totalorder %s22, 1
      %s286 = scalar_select %p285, %s22, 1
      %p287 = scmp.lt.s32.totalorder %s23, 1
      %s288 = scalar_select %p287, %s23, 1
      %s289 = smul.addr %s288, 2
      %s290 = smul.addr %s286, 4
      %s291 = sadd.s32 %s289, %s290
      %s292 = smul.addr %s291, 8
      %s293 = scalar_lea.vmem %s1, %s292
      %p294 = pneg %p86
      %p295 = pneg %p83
      %p296 = scmp.lt.s32.totalorder %s22, 1
      %s297 = scalar_select %p296, %s22, 1
      %p298 = scmp.lt.s32.totalorder %s23, 1
      %s299 = scalar_select %p298, %s23, 1
      %s300 = smul.addr %s299, 2
      %s301 = smul.addr %s297, 4
      %s302 = sadd.s32 %s300, %s301
      %s303 = smul.addr %s302, 8
      %s304 = scalar_lea.vmem %s2, %s303
      %p305 = pneg %p114
      %p306 = pneg %p111
      %p307 = scmp.lt.s32.totalorder %s21, 0
      %s308 = scalar_select %p307, %s21, 0
      %s309 = smul.addr %s308, 8
      %s310 = scalar_lea.vmem %s3, %s309
      %p311 = pneg %p140
      %p312 = pneg %p137
      %p313 = scmp.lt.s32.totalorder %s21, 0
      %s314 = scalar_select %p313, %s21, 0
      %s315 = scalar_lea.vmem %s4, %s314
      %p316 = pneg %p166
      %p317 = pneg %p163
      %p318 = pneg %p196
      %p319 = pneg %p193
      %s320 = smul.u32 8, %s23
      %p321 = scmp.lt.s32.totalorder %s22, 1
      %s322 = scalar_select %p321, %s22, 1
      %p323 = scmp.lt.s32.totalorder %s320, 15
      %s324 = scalar_select %p323, %s320, 15
      %p325 = scmp.lt.s32.totalorder %s21, 0
      %s326 = scalar_select %p325, %s21, 0
      %s327 = smul.addr %s324, 2
      %s328 = sadd.s32 %s326, %s327
      %s329 = smul.addr %s322, 32
      %s330 = sadd.s32 %s328, %s329
      %s331 = smul.addr %s330, 8
      %s332 = scalar_lea.vmem %s5, %s331
      %s333 = smul.u32 8, %s23
      %p334 = scmp.lt.s32.totalorder %s22, 1
      %s335 = scalar_select %p334, %s22, 1
      %p336 = scmp.lt.s32.totalorder %s333, 15
      %s337 = scalar_select %p336, %s333, 15
      %s338 = smul.addr %s337, 2
      %s339 = smul.addr %s335, 32
      %s340 = sadd.s32 %s338, %s339
      %s341 = smul.addr %s340, 8
      %s342 = scalar_lea.vmem %s0, %s341
      %s343 = smul.u32 8, %s23
      %p344 = scmp.lt.s32.totalorder %s22, 1
      %s345 = scalar_select %p344, %s22, 1
      %p346 = scmp.lt.s32.totalorder %s23, 1
      %s347 = scalar_select %p346, %s23, 1
      %s348 = smul.addr %s347, 2
      %s349 = smul.addr %s345, 4
      %s350 = sadd.s32 %s348, %s349
      %s351 = smul.addr %s350, 8
      %s352 = scalar_lea.vmem %s1, %s351
      %p353 = scmp.lt.s32.totalorder %s22, 1
      %s354 = scalar_select %p353, %s22, 1
      %p355 = scmp.lt.s32.totalorder %s23, 1
      %s356 = scalar_select %p355, %s23, 1
      %s357 = smul.addr %s356, 2
      %s358 = smul.addr %s354, 4
      %s359 = sadd.s32 %s357, %s358
      %s360 = smul.addr %s359, 8
      %s361 = scalar_lea.vmem %s2, %s360
      %p362 = scmp.lt.s32.totalorder %s21, 0
      %s363 = scalar_select %p362, %s21, 0
      %s364 = smul.addr %s363, 8
      %s365 = scalar_lea.vmem %s3, %s364
      %p366 = scmp.lt.s32.totalorder %s21, 0
      %s367 = scalar_select %p366, %s21, 0
      %s368 = scalar_lea.vmem %s4, %s367
      %s369 = smul.u32 8, %s23
      %p370 = scmp.lt.s32.totalorder %s22, 1
      %s371 = scalar_select %p370, %s22, 1
      %p372 = scmp.lt.s32.totalorder %s369, 15
      %s373 = scalar_select %p372, %s369, 15
      %p374 = scmp.lt.s32.totalorder %s21, 0
      %s375 = scalar_select %p374, %s21, 0
      %s376 = smul.addr %s373, 2
      %s377 = sadd.s32 %s375, %s376
      %s378 = smul.addr %s371, 32
      %s379 = sadd.s32 %s377, %s378
      %s380 = smul.addr %s379, 8
      %s381 = scalar_lea.vmem %s5, %s380
      %s382 = smul.u32 8, %s23
      %v383 = vld [vmem:[%s352] sm:$0xff]
      %v384 = vld [vmem:[%s352 + $0x8] sm:$0xff]
      %v385 = vld [vmem:[%s342] sm:$0xff]
      %v386 = vld [vmem:[%s342 + $0x8] sm:$0xff]
      %v387 = vld [vmem:[%s342 + $0x10] sm:$0xff]
      %v388 = vld [vmem:[%s342 + $0x18] sm:$0xff]
      %v389 = vld [vmem:[%s342 + $0x20] sm:$0xff]
      %v390 = vld [vmem:[%s342 + $0x28] sm:$0xff]
      %v391 = vld [vmem:[%s342 + $0x30] sm:$0xff]
      %v392 = vld [vmem:[%s342 + $0x38] sm:$0xff]
      %v393 = vld [vmem:[%s342 + $0x40] sm:$0xff]
      %v394 = vld [vmem:[%s342 + $0x48] sm:$0xff]
      %v395 = vld [vmem:[%s342 + $0x50] sm:$0xff]
      %v396 = vld [vmem:[%s342 + $0x58] sm:$0xff]
      %v397 = vld [vmem:[%s342 + $0x60] sm:$0xff]
      %v398 = vld [vmem:[%s342 + $0x68] sm:$0xff]
      %v399 = vld [vmem:[%s342 + $0x70] sm:$0xff]
      %v400 = vld [vmem:[%s342 + $0x78] sm:$0xff]
      %v401 = vld [vmem:[%s361] sm:$0xff]
      %v402 = vld [vmem:[%s361 + $0x8] sm:$0xff]
      %v403 = vlaneseq
      %v404 = vshrl.u32 %v403, 7
      %v405 = vadd.s32 %v404, 8
      %vm406 = vcmp.eq.s32.totalorder %v404, 0
      %vm407 = vcmp.eq.s32.totalorder %v405, 0
      %v408 = vrot.slane %v383, 7
      %v409 = vrot.slane %v384, 7
      %v410 = vrot.slane %v385, 7
      %v411 = vrot.slane %v386, 7
      %v412 = vrot.slane %v387, 7
      %v413 = vrot.slane %v388, 7
      %v414 = vrot.slane %v389, 7
      %v415 = vrot.slane %v390, 7
      %v416 = vrot.slane %v391, 7
      %v417 = vrot.slane %v392, 7
      %v418 = vrot.slane %v393, 7
      %v419 = vrot.slane %v394, 7
      %v420 = vrot.slane %v395, 7
      %v421 = vrot.slane %v396, 7
      %v422 = vrot.slane %v397, 7
      %v423 = vrot.slane %v398, 7
      %v424 = vrot.slane %v399, 7
      %v425 = vrot.slane %v400, 7
      %v426 = vrot.slane %v401, 7
      %v427 = vrot.slane %v402, 7
      %vm428 = vcmp.lt.s32.totalorder %v404, 1
      %v429 = vsel %vm428, %v426, %v427
      %v430 = vsel %vm428, %v425, %v426
      %v431 = vsel %vm428, %v424, %v425
      %v432 = vsel %vm428, %v423, %v424
      %v433 = vsel %vm428, %v422, %v423
      %v434 = vsel %vm428, %v421, %v422
      %v435 = vsel %vm428, %v420, %v421
      %v436 = vsel %vm428, %v419, %v420
      %v437 = vsel %vm428, %v418, %v419
      %v438 = vsel %vm428, %v417, %v418
      %v439 = vsel %vm428, %v416, %v417
      %v440 = vsel %vm428, %v415, %v416
      %v441 = vsel %vm428, %v414, %v415
      %v442 = vsel %vm428, %v413, %v414
      %v443 = vsel %vm428, %v412, %v413
      %v444 = vsel %vm428, %v411, %v412
      %v445 = vsel %vm428, %v410, %v411
      %v446 = vsel %vm428, %v409, %v410
      %v447 = vsel %vm428, %v408, %v409
      %v448 = vsel %vm428, %v427, %v408
      %v449 = vsel %vm406, 0.0, %v448
      %v450 = vsel %vm407, 0.0, %v447
      %v451 = vsel %vm406, 0.0, %v446
      %v452 = vsel %vm407, 0.0, %v445
      %v453 = vsel %vm406, 0.0, %v444
      %v454 = vsel %vm407, 0.0, %v443
      %v455 = vsel %vm406, 0.0, %v442
      %v456 = vsel %vm407, 0.0, %v441
      %v457 = vsel %vm406, 0.0, %v440
      %v458 = vsel %vm407, 0.0, %v439
      %v459 = vsel %vm406, 0.0, %v438
      %v460 = vsel %vm407, 0.0, %v437
      %v461 = vsel %vm406, 0.0, %v436
      %v462 = vsel %vm407, 0.0, %v435
      %v463 = vsel %vm406, 0.0, %v434
      %v464 = vsel %vm407, 0.0, %v433
      %v465 = vsel %vm406, 0.0, %v432
      %v466 = vsel %vm407, 0.0, %v431
      %v467 = vsel %vm406, 0.0, %v430
      %v468 = vsel %vm407, 0.0, %v429
      %vm469 = vcmp.eq.s32.totalorder %v404, 15
      %vm470 = vcmp.eq.s32.totalorder %v405, 15
      %v471 = vrot.slane %v383, 1
      %v472 = vrot.slane %v384, 1
      %v473 = vrot.slane %v385, 1
      %v474 = vrot.slane %v386, 1
      %v475 = vrot.slane %v387, 1
      %v476 = vrot.slane %v388, 1
      %v477 = vrot.slane %v389, 1
      %v478 = vrot.slane %v390, 1
      %v479 = vrot.slane %v391, 1
      %v480 = vrot.slane %v392, 1
      %v481 = vrot.slane %v393, 1
      %v482 = vrot.slane %v394, 1
      %v483 = vrot.slane %v395, 1
      %v484 = vrot.slane %v396, 1
      %v485 = vrot.slane %v397, 1
      %v486 = vrot.slane %v398, 1
      %v487 = vrot.slane %v399, 1
      %v488 = vrot.slane %v400, 1
      %v489 = vrot.slane %v401, 1
      %v490 = vrot.slane %v402, 1
      %vm491 = vcmp.lt.s32.totalorder %v404, 7
      %v492 = vsel %vm491, %v489, %v490
      %v493 = vsel %vm491, %v488, %v489
      %v494 = vsel %vm491, %v487, %v488
      %v495 = vsel %vm491, %v486, %v487
      %v496 = vsel %vm491, %v485, %v486
      %v497 = vsel %vm491, %v484, %v485
      %v498 = vsel %vm491, %v483, %v484
      %v499 = vsel %vm491, %v482, %v483
      %v500 = vsel %vm491, %v481, %v482
      %v501 = vsel %vm491, %v480, %v481
      %v502 = vsel %vm491, %v479, %v480
      %v503 = vsel %vm491, %v478, %v479
      %v504 = vsel %vm491, %v477, %v478
      %v505 = vsel %vm491, %v476, %v477
      %v506 = vsel %vm491, %v475, %v476
      %v507 = vsel %vm491, %v474, %v475
      %v508 = vsel %vm491, %v473, %v474
      %v509 = vsel %vm491, %v472, %v473
      %v510 = vsel %vm491, %v471, %v472
      %v511 = vsel %vm491, %v490, %v471
      %v512 = vsel %vm469, 0.0, %v510
      %v513 = vsel %vm470, 0.0, %v509
      %v514 = vsel %vm469, 0.0, %v508
      %v515 = vsel %vm470, 0.0, %v507
      %v516 = vsel %vm469, 0.0, %v506
      %v517 = vsel %vm470, 0.0, %v505
      %v518 = vsel %vm469, 0.0, %v504
      %v519 = vsel %vm470, 0.0, %v503
      %v520 = vsel %vm469, 0.0, %v502
      %v521 = vsel %vm470, 0.0, %v501
      %v522 = vsel %vm469, 0.0, %v500
      %v523 = vsel %vm470, 0.0, %v499
      %v524 = vsel %vm469, 0.0, %v498
      %v525 = vsel %vm470, 0.0, %v497
      %v526 = vsel %vm469, 0.0, %v496
      %v527 = vsel %vm470, 0.0, %v495
      %v528 = vsel %vm469, 0.0, %v494
      %v529 = vsel %vm470, 0.0, %v493
      %v530 = vsel %vm469, 0.0, %v492
      %v531 = vsel %vm470, 0.0, %v511
      %552 = vrot.lane.b32.xlu0 %v383, 4
      %v553 = vpop.permute.xlu0 %552
      %554 = vrot.lane.b32.xlu0 %v384, 4
      %v555 = vpop.permute.xlu0 %554
      %556 = vrot.lane.b32.xlu0 %v385, 4
      %v557 = vpop.permute.xlu0 %556
      %558 = vrot.lane.b32.xlu0 %v386, 4
      %v559 = vpop.permute.xlu0 %558
      %560 = vrot.lane.b32.xlu0 %v387, 4
      %v561 = vpop.permute.xlu0 %560
      %562 = vrot.lane.b32.xlu0 %v388, 4
      %v563 = vpop.permute.xlu0 %562
      %564 = vrot.lane.b32.xlu0 %v389, 4
      %v565 = vpop.permute.xlu0 %564
      %566 = vrot.lane.b32.xlu0 %v390, 4
      %v567 = vpop.permute.xlu0 %566
      %568 = vrot.lane.b32.xlu0 %v391, 4
      %v569 = vpop.permute.xlu0 %568
      %570 = vrot.lane.b32.xlu0 %v392, 4
      %v571 = vpop.permute.xlu0 %570
      %572 = vrot.lane.b32.xlu0 %v393, 4
      %v573 = vpop.permute.xlu0 %572
      %574 = vrot.lane.b32.xlu0 %v394, 4
      %v575 = vpop.permute.xlu0 %574
      %576 = vrot.lane.b32.xlu0 %v395, 4
      %v577 = vpop.permute.xlu0 %576
      %578 = vrot.lane.b32.xlu0 %v396, 4
      %v579 = vpop.permute.xlu0 %578
      %580 = vrot.lane.b32.xlu0 %v397, 4
      %v581 = vpop.permute.xlu0 %580
      %582 = vrot.lane.b32.xlu0 %v398, 4
      %v583 = vpop.permute.xlu0 %582
      %584 = vrot.lane.b32.xlu0 %v399, 4
      %v585 = vpop.permute.xlu0 %584
      %586 = vrot.lane.b32.xlu0 %v400, 4
      %v587 = vpop.permute.xlu0 %586
      %588 = vrot.lane.b32.xlu0 %v401, 4
      %v589 = vpop.permute.xlu0 %588
      %590 = vrot.lane.b32.xlu0 %v402, 4
      %v591 = vpop.permute.xlu0 %590
      %632 = vrot.lane.b32.xlu0 %v512, 8
      %v633 = vpop.permute.xlu0 %632
      %634 = vrot.lane.b32.xlu0 %v513, 8
      %v635 = vpop.permute.xlu0 %634
      %636 = vrot.lane.b32.xlu0 %v514, 8
      %v637 = vpop.permute.xlu0 %636
      %638 = vrot.lane.b32.xlu0 %v515, 8
      %v639 = vpop.permute.xlu0 %638
      %640 = vrot.lane.b32.xlu0 %v516, 8
      %v641 = vpop.permute.xlu0 %640
      %642 = vrot.lane.b32.xlu0 %v517, 8
      %v643 = vpop.permute.xlu0 %642
      %644 = vrot.lane.b32.xlu0 %v518, 8
      %v645 = vpop.permute.xlu0 %644
      %646 = vrot.lane.b32.xlu0 %v519, 8
      %v647 = vpop.permute.xlu0 %646
      %648 = vrot.lane.b32.xlu0 %v520, 8
      %v649 = vpop.permute.xlu0 %648
      %650 = vrot.lane.b32.xlu0 %v521, 8
      %v651 = vpop.permute.xlu0 %650
      %652 = vrot.lane.b32.xlu0 %v522, 8
      %v653 = vpop.permute.xlu0 %652
      %654 = vrot.lane.b32.xlu0 %v523, 8
      %v655 = vpop.permute.xlu0 %654
      %656 = vrot.lane.b32.xlu0 %v524, 8
      %v657 = vpop.permute.xlu0 %656
      %658 = vrot.lane.b32.xlu0 %v525, 8
      %v659 = vpop.permute.xlu0 %658
      %660 = vrot.lane.b32.xlu0 %v526, 8
      %v661 = vpop.permute.xlu0 %660
      %662 = vrot.lane.b32.xlu0 %v527, 8
      %v663 = vpop.permute.xlu0 %662
      %664 = vrot.lane.b32.xlu0 %v528, 8
      %v665 = vpop.permute.xlu0 %664
      %666 = vrot.lane.b32.xlu0 %v529, 8
      %v667 = vpop.permute.xlu0 %666
      %668 = vrot.lane.b32.xlu0 %v530, 8
      %v669 = vpop.permute.xlu0 %668
      %670 = vrot.lane.b32.xlu0 %v531, 8
      %v671 = vpop.permute.xlu0 %670
      %vm692 = vcmask 31744
      %v693 = vsel %vm692, %v449, %v553
      %v694 = vsel %vm692, %v450, %v555
      %v695 = vsel %vm692, %v451, %v557
      %v696 = vsel %vm692, %v452, %v559
      %v697 = vsel %vm692, %v453, %v561
      %v698 = vsel %vm692, %v454, %v563
      %v699 = vsel %vm692, %v455, %v565
      %v700 = vsel %vm692, %v456, %v567
      %v701 = vsel %vm692, %v457, %v569
      %v702 = vsel %vm692, %v458, %v571
      %v703 = vsel %vm692, %v459, %v573
      %v704 = vsel %vm692, %v460, %v575
      %v705 = vsel %vm692, %v461, %v577
      %v706 = vsel %vm692, %v462, %v579
      %v707 = vsel %vm692, %v463, %v581
      %v708 = vsel %vm692, %v464, %v583
      %v709 = vsel %vm692, %v465, %v585
      %v710 = vsel %vm692, %v466, %v587
      %v711 = vsel %vm692, %v467, %v589
      %v712 = vsel %vm692, %v468, %v591
      %vm713 = vcmask 64512
      %v714 = vsel %vm713, %v693, %v633
      %v715 = vsel %vm713, %v694, %v635
      %v716 = vsel %vm713, %v695, %v637
      %v717 = vsel %vm713, %v696, %v639
      %v718 = vsel %vm713, %v697, %v641
      %v719 = vsel %vm713, %v698, %v643
      %v720 = vsel %vm713, %v699, %v645
      %v721 = vsel %vm713, %v700, %v647
      %v722 = vsel %vm713, %v701, %v649
      %v723 = vsel %vm713, %v702, %v651
      %v724 = vsel %vm713, %v703, %v653
      %v725 = vsel %vm713, %v704, %v655
      %v726 = vsel %vm713, %v705, %v657
      %v727 = vsel %vm713, %v706, %v659
      %v728 = vsel %vm713, %v707, %v661
      %v729 = vsel %vm713, %v708, %v663
      %v730 = vsel %vm713, %v709, %v665
      %v731 = vsel %vm713, %v710, %v667
      %v732 = vsel %vm713, %v711, %v669
      %v733 = vsel %vm713, %v712, %v671
      %v734 = vld [vmem:[%s365] sm:$0xff]
      %v735 = vld [vmem:[%s365 + $0x8] sm:$0xf]
      %s736 = scalar_lea.vmem %s365, 16
      %v737 = vld [vmem:[%s736] sm:$0xff]
      %v738 = vld [vmem:[%s736 + $0x8] sm:$0xf]
      %vm739 = vcmask 97280
      %v741 = vsel %vm739, %v716, 0
      %v744 = vsel %vm739, %v717, 0
      %v747 = vsel %vm739, %v718, 0
      %v750 = vsel %vm739, %v719, 0
      %v753 = vsel %vm739, %v720, 0
      %v756 = vsel %vm739, %v721, 0
      %v759 = vsel %vm739, %v722, 0
      %v762 = vsel %vm739, %v723, 0
      %v765 = vsel %vm739, %v724, 0
      %v768 = vsel %vm739, %v725, 0
      %v771 = vsel %vm739, %v726, 0
      %v774 = vsel %vm739, %v727, 0
      %v777 = vsel %vm739, %v728, 0
      %v780 = vsel %vm739, %v729, 0
      %v783 = vsel %vm739, %v730, 0
      %v786 = vsel %vm739, %v731, 0
      %vm788 = vcmask 1043456
      %v790 = vsel %vm788, %v738, 0
      %792 = vmatprep.subr.mxu0 0.0
      %793 = vmatpush1.msra.mxu0 %v737
      %794 = vmatprep.subr.mxu0 0.0
      %795 = vmatpush1.msra.mxu0 %v790
      %796 = vmatprep.subr.mxu0 0.0
      %797 = vmatpush1.msra.mxu0 0.0
      %798 = vmatprep.subr.mxu0 0.0
      %799 = vmatpush1.msra.mxu0 0.0
      %800 = vmatprep.subr.mxu0 0.0
      %801 = vmatpush1.msra.mxu0 0.0
      %802 = vmatprep.subr.mxu0 0.0
      %803 = vmatpush1.msra.mxu0 0.0
      %804 = vmatprep.subr.mxu0 0.0
      %805 = vmatpush1.msra.mxu0 0.0
      %806 = vmatprep.subr.mxu0 0.0
      %807 = vmatpush1.msra.mxu0 0.0
      %808 = vmatprep.subr.mxu0 0.0
      %809 = vmatpush1.msra.mxu0 0.0
      %810 = vmatprep.subr.mxu0 0.0
      %811 = vmatpush1.msra.mxu0 0.0
      %812 = vmatprep.subr.mxu0 0.0
      %813 = vmatpush1.msra.mxu0 0.0
      %814 = vmatprep.subr.mxu0 0.0
      %815 = vmatpush1.msra.mxu0 0.0
      %816 = vmatprep.subr.mxu0 0.0
      %817 = vmatpush1.msra.mxu0 0.0
      %818 = vmatprep.subr.mxu0 0.0
      %819 = vmatpush1.msra.mxu0 0.0
      %820 = vmatprep.subr.mxu0 0.0
      %821 = vmatpush1.msra.mxu0 0.0
      %822 = vmatprep.subr.mxu0 0.0
      %823 = vmatpush1.msra.mxu0 0.0
      %824 = vmatprep.subr.mxu0 0.0
      %825 = vmatpush1.msra.mxu0 0.0
      %826 = vmatprep.subr.mxu0 0.0
      %827 = vmatpush1.msra.mxu0 0.0
      %828 = vmatprep.subr.mxu0 0.0
      %829 = vmatpush1.msra.mxu0 0.0
      %830 = vmatprep.subr.mxu0 0.0
      %831 = vmatpush1.msra.mxu0 0.0
      %832 = vmatprep.subr.mxu0 0.0
      %833 = vmatpush1.msra.mxu0 0.0
      %834 = vmatprep.subr.mxu0 0.0
      %835 = vmatpush1.msra.mxu0 0.0
      %836 = vmatprep.subr.mxu0 0.0
      %837 = vmatpush1.msra.mxu0 0.0
      %838 = vmatprep.subr.mxu0 0.0
      %839 = vmatpush1.msra.mxu0 0.0
      %840 = vmatprep.subr.mxu0 0.0
      %841 = vmatpush1.msra.mxu0 0.0
      %842 = vmatprep.subr.mxu0 0.0
      %843 = vmatpush1.msra.mxu0 0.0
      %844 = vmatprep.subr.mxu0 0.0
      %845 = vmatpush1.msra.mxu0 0.0
      %846 = vmatprep.subr.mxu0 0.0
      %847 = vmatpush1.msra.mxu0 0.0
      %848 = vmatprep.subr.mxu0 0.0
      %849 = vmatpush1.msra.mxu0 0.0
      %850 = vmatprep.subr.mxu0 0.0
      %851 = vmatpush1.msra.mxu0 0.0
      %852 = vmatprep.subr.mxu0 0.0
      %853 = vmatpush1.msra.mxu0 0.0
      %854 = vmatprep.subr.mxu0 0.0
      %855 = vmatpush1.msra.mxu0 0.0
      %856 = vmatprep.mubr.f32.mxu0 0.0
      %857 = vmatmul.mubr.f32.gmra.mrb[0].mxu0 %v741
      %v858 = vpop.f32.mrb[0].mxu0
      %v859 = vadd.f32 0.0, %v858
      %v860 = vpop.f32.mrb[0].mxu0
      %861 = vmatprep.mubr.f32.mxu0 0.0
      %862 = vmatmul.mubr.f32.gmra.mrb[0].mxu0 %v744
      %v863 = vpop.f32.mrb[0].mxu0
      %v864 = vadd.f32 0.0, %v863
      %v865 = vpop.f32.mrb[0].mxu0
      %866 = vmatprep.mubr.f32.mxu0 0.0
      %867 = vmatmul.mubr.f32.gmra.mrb[0].mxu0 %v747
      %v868 = vpop.f32.mrb[0].mxu0
      %v869 = vadd.f32 0.0, %v868
      %v870 = vpop.f32.mrb[0].mxu0
      %871 = vmatprep.mubr.f32.mxu0 0.0
      %872 = vmatmul.mubr.f32.gmra.mrb[0].mxu0 %v750
      %v873 = vpop.f32.mrb[0].mxu0
      %v874 = vadd.f32 0.0, %v873
      %v875 = vpop.f32.mrb[0].mxu0
      %876 = vmatprep.mubr.f32.mxu0 0.0
      %877 = vmatmul.mubr.f32.gmra.mrb[0].mxu0 %v753
      %v878 = vpop.f32.mrb[0].mxu0
      %v879 = vadd.f32 0.0, %v878
      %v880 = vpop.f32.mrb[0].mxu0
      %881 = vmatprep.mubr.f32.mxu0 0.0
      %882 = vmatmul.mubr.f32.gmra.mrb[0].mxu0 %v756
      %v883 = vpop.f32.mrb[0].mxu0
      %v884 = vadd.f32 0.0, %v883
      %v885 = vpop.f32.mrb[0].mxu0
      %886 = vmatprep.mubr.f32.mxu0 0.0
      %887 = vmatmul.mubr.f32.gmra.mrb[0].mxu0 %v759
      %v888 = vpop.f32.mrb[0].mxu0
      %v889 = vadd.f32 0.0, %v888
      %v890 = vpop.f32.mrb[0].mxu0
      %891 = vmatprep.mubr.f32.mxu0 0.0
      %892 = vmatmul.mubr.f32.gmra.mrb[0].mxu0 %v762
      %v893 = vpop.f32.mrb[0].mxu0
      %v894 = vadd.f32 0.0, %v893
      %v895 = vpop.f32.mrb[0].mxu0
      %896 = vmatprep.mubr.f32.mxu0 0.0
      %897 = vmatmul.mubr.f32.gmra.mrb[0].mxu0 %v765
      %v898 = vpop.f32.mrb[0].mxu0
      %v899 = vadd.f32 0.0, %v898
      %v900 = vpop.f32.mrb[0].mxu0
      %901 = vmatprep.mubr.f32.mxu0 0.0
      %902 = vmatmul.mubr.f32.gmra.mrb[0].mxu0 %v768
      %v903 = vpop.f32.mrb[0].mxu0
      %v904 = vadd.f32 0.0, %v903
      %v905 = vpop.f32.mrb[0].mxu0
      %906 = vmatprep.mubr.f32.mxu0 0.0
      %907 = vmatmul.mubr.f32.gmra.mrb[0].mxu0 %v771
      %v908 = vpop.f32.mrb[0].mxu0
      %v909 = vadd.f32 0.0, %v908
      %v910 = vpop.f32.mrb[0].mxu0
      %911 = vmatprep.mubr.f32.mxu0 0.0
      %912 = vmatmul.mubr.f32.gmra.mrb[0].mxu0 %v774
      %v913 = vpop.f32.mrb[0].mxu0
      %v914 = vadd.f32 0.0, %v913
      %v915 = vpop.f32.mrb[0].mxu0
      %916 = vmatprep.mubr.f32.mxu0 0.0
      %917 = vmatmul.mubr.f32.gmra.mrb[0].mxu0 %v777
      %v918 = vpop.f32.mrb[0].mxu0
      %v919 = vadd.f32 0.0, %v918
      %v920 = vpop.f32.mrb[0].mxu0
      %921 = vmatprep.mubr.f32.mxu0 0.0
      %922 = vmatmul.mubr.f32.gmra.mrb[0].mxu0 %v780
      %v923 = vpop.f32.mrb[0].mxu0
      %v924 = vadd.f32 0.0, %v923
      %v925 = vpop.f32.mrb[0].mxu0
      %926 = vmatprep.mubr.f32.mxu0 0.0
      %927 = vmatmul.mubr.f32.gmra.mrb[0].mxu0 %v783
      %v928 = vpop.f32.mrb[0].mxu0
      %v929 = vadd.f32 0.0, %v928
      %v930 = vpop.f32.mrb[0].mxu0
      %931 = vmatprep.mubr.f32.mxu0 0.0
      %932 = vmatmul.mubr.f32.gmra.mrb[0].mxu0 %v786
      %v933 = vpop.f32.mrb[0].mxu0
      %v934 = vadd.f32 0.0, %v933
      %v935 = vpop.f32.mrb[0].mxu0
      %936 = vdwg.mxu0
      %v938 = vsel %vm739, %v714, 0
      %v941 = vsel %vm739, %v715, 0
      %v944 = vsel %vm788, %v735, 0
      %946 = vmatprep.subr.mxu0 0.0
      %947 = vmatpush1.msra.mxu0 %v734
      %948 = vmatprep.subr.mxu0 0.0
      %949 = vmatpush1.msra.mxu0 %v944
      %950 = vmatprep.subr.mxu0 0.0
      %951 = vmatpush1.msra.mxu0 0.0
      %952 = vmatprep.subr.mxu0 0.0
      %953 = vmatpush1.msra.mxu0 0.0
      %954 = vmatprep.subr.mxu0 0.0
      %955 = vmatpush1.msra.mxu0 0.0
      %956 = vmatprep.subr.mxu0 0.0
      %957 = vmatpush1.msra.mxu0 0.0
      %958 = vmatprep.subr.mxu0 0.0
      %959 = vmatpush1.msra.mxu0 0.0
      %960 = vmatprep.subr.mxu0 0.0
      %961 = vmatpush1.msra.mxu0 0.0
      %962 = vmatprep.subr.mxu0 0.0
      %963 = vmatpush1.msra.mxu0 0.0
      %964 = vmatprep.subr.mxu0 0.0
      %965 = vmatpush1.msra.mxu0 0.0
      %966 = vmatprep.subr.mxu0 0.0
      %967 = vmatpush1.msra.mxu0 0.0
      %968 = vmatprep.subr.mxu0 0.0
      %969 = vmatpush1.msra.mxu0 0.0
      %970 = vmatprep.subr.mxu0 0.0
      %971 = vmatpush1.msra.mxu0 0.0
      %972 = vmatprep.subr.mxu0 0.0
      %973 = vmatpush1.msra.mxu0 0.0
      %974 = vmatprep.subr.mxu0 0.0
      %975 = vmatpush1.msra.mxu0 0.0
      %976 = vmatprep.subr.mxu0 0.0
      %977 = vmatpush1.msra.mxu0 0.0
      %978 = vmatprep.subr.mxu0 0.0
      %979 = vmatpush1.msra.mxu0 0.0
      %980 = vmatprep.subr.mxu0 0.0
      %981 = vmatpush1.msra.mxu0 0.0
      %982 = vmatprep.subr.mxu0 0.0
      %983 = vmatpush1.msra.mxu0 0.0
      %984 = vmatprep.subr.mxu0 0.0
      %985 = vmatpush1.msra.mxu0 0.0
      %986 = vmatprep.subr.mxu0 0.0
      %987 = vmatpush1.msra.mxu0 0.0
      %988 = vmatprep.subr.mxu0 0.0
      %989 = vmatpush1.msra.mxu0 0.0
      %990 = vmatprep.subr.mxu0 0.0
      %991 = vmatpush1.msra.mxu0 0.0
      %992 = vmatprep.subr.mxu0 0.0
      %993 = vmatpush1.msra.mxu0 0.0
      %994 = vmatprep.subr.mxu0 0.0
      %995 = vmatpush1.msra.mxu0 0.0
      %996 = vmatprep.subr.mxu0 0.0
      %997 = vmatpush1.msra.mxu0 0.0
      %998 = vmatprep.subr.mxu0 0.0
      %999 = vmatpush1.msra.mxu0 0.0
      %1000 = vmatprep.subr.mxu0 0.0
      %1001 = vmatpush1.msra.mxu0 0.0
      %1002 = vmatprep.subr.mxu0 0.0
      %1003 = vmatpush1.msra.mxu0 0.0
      %1004 = vmatprep.subr.mxu0 0.0
      %1005 = vmatpush1.msra.mxu0 0.0
      %1006 = vmatprep.subr.mxu0 0.0
      %1007 = vmatpush1.msra.mxu0 0.0
      %1008 = vmatprep.subr.mxu0 0.0
      %1009 = vmatpush1.msra.mxu0 0.0
      %1010 = vmatprep.mubr.f32.mxu0 0.0
      %1011 = vmatmul.mubr.f32.gmra.mrb[0].mxu0 %v938
      %v1012 = vpop.f32.mrb[0].mxu0
      %v1013 = vadd.f32 %v859, %v1012
      %v1014 = vpop.f32.mrb[0].mxu0
      %1015 = vmatprep.mubr.f32.mxu0 0.0
      %1016 = vmatmul.mubr.f32.gmra.mrb[0].mxu0 %v941
      %v1017 = vpop.f32.mrb[0].mxu0
      %v1018 = vadd.f32 %v864, %v1017
      %v1019 = vpop.f32.mrb[0].mxu0
      %1020 = vmatprep.mubr.f32.mxu0 0.0
      %1021 = vmatmul.mubr.f32.gmra.mrb[0].mxu0 %v741
      %v1022 = vpop.f32.mrb[0].mxu0
      %v1023 = vadd.f32 %v869, %v1022
      %v1024 = vpop.f32.mrb[0].mxu0
      %1025 = vmatprep.mubr.f32.mxu0 0.0
      %1026 = vmatmul.mubr.f32.gmra.mrb[0].mxu0 %v744
      %v1027 = vpop.f32.mrb[0].mxu0
      %v1028 = vadd.f32 %v874, %v1027
      %v1029 = vpop.f32.mrb[0].mxu0
      %1030 = vmatprep.mubr.f32.mxu0 0.0
      %1031 = vmatmul.mubr.f32.gmra.mrb[0].mxu0 %v747
      %v1032 = vpop.f32.mrb[0].mxu0
      %v1033 = vadd.f32 %v879, %v1032
      %v1034 = vpop.f32.mrb[0].mxu0
      %1035 = vmatprep.mubr.f32.mxu0 0.0
      %1036 = vmatmul.mubr.f32.gmra.mrb[0].mxu0 %v750
      %v1037 = vpop.f32.mrb[0].mxu0
      %v1038 = vadd.f32 %v884, %v1037
      %v1039 = vpop.f32.mrb[0].mxu0
      %1040 = vmatprep.mubr.f32.mxu0 0.0
      %1041 = vmatmul.mubr.f32.gmra.mrb[0].mxu0 %v753
      %v1042 = vpop.f32.mrb[0].mxu0
      %v1043 = vadd.f32 %v889, %v1042
      %v1044 = vpop.f32.mrb[0].mxu0
      %1045 = vmatprep.mubr.f32.mxu0 0.0
      %1046 = vmatmul.mubr.f32.gmra.mrb[0].mxu0 %v756
      %v1047 = vpop.f32.mrb[0].mxu0
      %v1048 = vadd.f32 %v894, %v1047
      %v1049 = vpop.f32.mrb[0].mxu0
      %1050 = vmatprep.mubr.f32.mxu0 0.0
      %1051 = vmatmul.mubr.f32.gmra.mrb[0].mxu0 %v759
      %v1052 = vpop.f32.mrb[0].mxu0
      %v1053 = vadd.f32 %v899, %v1052
      %v1054 = vpop.f32.mrb[0].mxu0
      %1055 = vmatprep.mubr.f32.mxu0 0.0
      %1056 = vmatmul.mubr.f32.gmra.mrb[0].mxu0 %v762
      %v1057 = vpop.f32.mrb[0].mxu0
      %v1058 = vadd.f32 %v904, %v1057
      %v1059 = vpop.f32.mrb[0].mxu0
      %1060 = vmatprep.mubr.f32.mxu0 0.0
      %1061 = vmatmul.mubr.f32.gmra.mrb[0].mxu0 %v765
      %v1062 = vpop.f32.mrb[0].mxu0
      %v1063 = vadd.f32 %v909, %v1062
      %v1064 = vpop.f32.mrb[0].mxu0
      %1065 = vmatprep.mubr.f32.mxu0 0.0
      %1066 = vmatmul.mubr.f32.gmra.mrb[0].mxu0 %v768
      %v1067 = vpop.f32.mrb[0].mxu0
      %v1068 = vadd.f32 %v914, %v1067
      %v1069 = vpop.f32.mrb[0].mxu0
      %1070 = vmatprep.mubr.f32.mxu0 0.0
      %1071 = vmatmul.mubr.f32.gmra.mrb[0].mxu0 %v771
      %v1072 = vpop.f32.mrb[0].mxu0
      %v1073 = vadd.f32 %v919, %v1072
      %v1074 = vpop.f32.mrb[0].mxu0
      %1075 = vmatprep.mubr.f32.mxu0 0.0
      %1076 = vmatmul.mubr.f32.gmra.mrb[0].mxu0 %v774
      %v1077 = vpop.f32.mrb[0].mxu0
      %v1078 = vadd.f32 %v924, %v1077
      %v1079 = vpop.f32.mrb[0].mxu0
      %1080 = vmatprep.mubr.f32.mxu0 0.0
      %1081 = vmatmul.mubr.f32.gmra.mrb[0].mxu0 %v777
      %v1082 = vpop.f32.mrb[0].mxu0
      %v1083 = vadd.f32 %v929, %v1082
      %v1084 = vpop.f32.mrb[0].mxu0
      %1085 = vmatprep.mubr.f32.mxu0 0.0
      %1086 = vmatmul.mubr.f32.gmra.mrb[0].mxu0 %v780
      %v1087 = vpop.f32.mrb[0].mxu0
      %v1088 = vadd.f32 %v934, %v1087
      %v1089 = vpop.f32.mrb[0].mxu0
      %1090 = vdwg.mxu0
      %s1091 = scalar_lea.vmem %s365, 32
      %v1092 = vld [vmem:[%s1091] sm:$0xff]
      %v1093 = vld [vmem:[%s1091 + $0x8] sm:$0xf]
      %v1095 = vsel %vm739, %v732, 0
      %v1098 = vsel %vm739, %v733, 0
      %v1101 = vsel %vm788, %v1093, 0
      %1103 = vmatprep.subr.mxu0 0.0
      %1104 = vmatpush1.msra.mxu0 %v1092
      %1105 = vmatprep.subr.mxu0 0.0
      %1106 = vmatpush1.msra.mxu0 %v1101
      %1107 = vmatprep.subr.mxu0 0.0
      %1108 = vmatpush1.msra.mxu0 0.0
      %1109 = vmatprep.subr.mxu0 0.0
      %1110 = vmatpush1.msra.mxu0 0.0
      %1111 = vmatprep.subr.mxu0 0.0
      %1112 = vmatpush1.msra.mxu0 0.0
      %1113 = vmatprep.subr.mxu0 0.0
      %1114 = vmatpush1.msra.mxu0 0.0
      %1115 = vmatprep.subr.mxu0 0.0
      %1116 = vmatpush1.msra.mxu0 0.0
      %1117 = vmatprep.subr.mxu0 0.0
      %1118 = vmatpush1.msra.mxu0 0.0
      %1119 = vmatprep.subr.mxu0 0.0
      %1120 = vmatpush1.msra.mxu0 0.0
      %1121 = vmatprep.subr.mxu0 0.0
      %1122 = vmatpush1.msra.mxu0 0.0
      %1123 = vmatprep.subr.mxu0 0.0
      %1124 = vmatpush1.msra.mxu0 0.0
      %1125 = vmatprep.subr.mxu0 0.0
      %1126 = vmatpush1.msra.mxu0 0.0
      %1127 = vmatprep.subr.mxu0 0.0
      %1128 = vmatpush1.msra.mxu0 0.0
      %1129 = vmatprep.subr.mxu0 0.0
      %1130 = vmatpush1.msra.mxu0 0.0
      %1131 = vmatprep.subr.mxu0 0.0
      %1132 = vmatpush1.msra.mxu0 0.0
      %1133 = vmatprep.subr.mxu0 0.0
      %1134 = vmatpush1.msra.mxu0 0.0
      %1135 = vmatprep.subr.mxu0 0.0
      %1136 = vmatpush1.msra.mxu0 0.0
      %1137 = vmatprep.subr.mxu0 0.0
      %1138 = vmatpush1.msra.mxu0 0.0
      %1139 = vmatprep.subr.mxu0 0.0
      %1140 = vmatpush1.msra.mxu0 0.0
      %1141 = vmatprep.subr.mxu0 0.0
      %1142 = vmatpush1.msra.mxu0 0.0
      %1143 = vmatprep.subr.mxu0 0.0
      %1144 = vmatpush1.msra.mxu0 0.0
      %1145 = vmatprep.subr.mxu0 0.0
      %1146 = vmatpush1.msra.mxu0 0.0
      %1147 = vmatprep.subr.mxu0 0.0
      %1148 = vmatpush1.msra.mxu0 0.0
      %1149 = vmatprep.subr.mxu0 0.0
      %1150 = vmatpush1.msra.mxu0 0.0
      %1151 = vmatprep.subr.mxu0 0.0
      %1152 = vmatpush1.msra.mxu0 0.0
      %1153 = vmatprep.subr.mxu0 0.0
      %1154 = vmatpush1.msra.mxu0 0.0
      %1155 = vmatprep.subr.mxu0 0.0
      %1156 = vmatpush1.msra.mxu0 0.0
      %1157 = vmatprep.subr.mxu0 0.0
      %1158 = vmatpush1.msra.mxu0 0.0
      %1159 = vmatprep.subr.mxu0 0.0
      %1160 = vmatpush1.msra.mxu0 0.0
      %1161 = vmatprep.subr.mxu0 0.0
      %1162 = vmatpush1.msra.mxu0 0.0
      %1163 = vmatprep.subr.mxu0 0.0
      %1164 = vmatpush1.msra.mxu0 0.0
      %1165 = vmatprep.subr.mxu0 0.0
      %1166 = vmatpush1.msra.mxu0 0.0
      %1167 = vmatprep.mubr.f32.mxu0 0.0
      %1168 = vmatmul.mubr.f32.gmra.mrb[0].mxu0 %v747
      %v1169 = vpop.f32.mrb[0].mxu0
      %v1170 = vadd.f32 0.0, %v1169
      %v1171 = vpop.f32.mrb[0].mxu0
      %1172 = vmatprep.mubr.f32.mxu0 0.0
      %1173 = vmatmul.mubr.f32.gmra.mrb[0].mxu0 %v750
      %v1174 = vpop.f32.mrb[0].mxu0
      %v1175 = vadd.f32 0.0, %v1174
      %v1176 = vpop.f32.mrb[0].mxu0
      %1177 = vmatprep.mubr.f32.mxu0 0.0
      %1178 = vmatmul.mubr.f32.gmra.mrb[0].mxu0 %v753
      %v1179 = vpop.f32.mrb[0].mxu0
      %v1180 = vadd.f32 0.0, %v1179
      %v1181 = vpop.f32.mrb[0].mxu0
      %1182 = vmatprep.mubr.f32.mxu0 0.0
      %1183 = vmatmul.mubr.f32.gmra.mrb[0].mxu0 %v756
      %v1184 = vpop.f32.mrb[0].mxu0
      %v1185 = vadd.f32 0.0, %v1184
      %v1186 = vpop.f32.mrb[0].mxu0
      %1187 = vmatprep.mubr.f32.mxu0 0.0
      %1188 = vmatmul.mubr.f32.gmra.mrb[0].mxu0 %v759
      %v1189 = vpop.f32.mrb[0].mxu0
      %v1190 = vadd.f32 0.0, %v1189
      %v1191 = vpop.f32.mrb[0].mxu0
      %1192 = vmatprep.mubr.f32.mxu0 0.0
      %1193 = vmatmul.mubr.f32.gmra.mrb[0].mxu0 %v762
      %v1194 = vpop.f32.mrb[0].mxu0
      %v1195 = vadd.f32 0.0, %v1194
      %v1196 = vpop.f32.mrb[0].mxu0
      %1197 = vmatprep.mubr.f32.mxu0 0.0
      %1198 = vmatmul.mubr.f32.gmra.mrb[0].mxu0 %v765
      %v1199 = vpop.f32.mrb[0].mxu0
      %v1200 = vadd.f32 0.0, %v1199
      %v1201 = vpop.f32.mrb[0].mxu0
      %1202 = vmatprep.mubr.f32.mxu0 0.0
      %1203 = vmatmul.mubr.f32.gmra.mrb[0].mxu0 %v768
      %v1204 = vpop.f32.mrb[0].mxu0
      %v1205 = vadd.f32 0.0, %v1204
      %v1206 = vpop.f32.mrb[0].mxu0
      %1207 = vmatprep.mubr.f32.mxu0 0.0
      %1208 = vmatmul.mubr.f32.gmra.mrb[0].mxu0 %v771
      %v1209 = vpop.f32.mrb[0].mxu0
      %v1210 = vadd.f32 0.0, %v1209
      %v1211 = vpop.f32.mrb[0].mxu0
      %1212 = vmatprep.mubr.f32.mxu0 0.0
      %1213 = vmatmul.mubr.f32.gmra.mrb[0].mxu0 %v774
      %v1214 = vpop.f32.mrb[0].mxu0
      %v1215 = vadd.f32 0.0, %v1214
      %v1216 = vpop.f32.mrb[0].mxu0
      %1217 = vmatprep.mubr.f32.mxu0 0.0
      %1218 = vmatmul.mubr.f32.gmra.mrb[0].mxu0 %v777
      %v1219 = vpop.f32.mrb[0].mxu0
      %v1220 = vadd.f32 0.0, %v1219
      %v1221 = vpop.f32.mrb[0].mxu0
      %1222 = vmatprep.mubr.f32.mxu0 0.0
      %1223 = vmatmul.mubr.f32.gmra.mrb[0].mxu0 %v780
      %v1224 = vpop.f32.mrb[0].mxu0
      %v1225 = vadd.f32 0.0, %v1224
      %v1226 = vpop.f32.mrb[0].mxu0
      %1227 = vmatprep.mubr.f32.mxu0 0.0
      %1228 = vmatmul.mubr.f32.gmra.mrb[0].mxu0 %v783
      %v1229 = vpop.f32.mrb[0].mxu0
      %v1230 = vadd.f32 0.0, %v1229
      %v1231 = vpop.f32.mrb[0].mxu0
      %1232 = vmatprep.mubr.f32.mxu0 0.0
      %1233 = vmatmul.mubr.f32.gmra.mrb[0].mxu0 %v786
      %v1234 = vpop.f32.mrb[0].mxu0
      %v1235 = vadd.f32 0.0, %v1234
      %v1236 = vpop.f32.mrb[0].mxu0
      %1237 = vmatprep.mubr.f32.mxu0 0.0
      %1238 = vmatmul.mubr.f32.gmra.mrb[0].mxu0 %v1095
      %v1239 = vpop.f32.mrb[0].mxu0
      %v1240 = vadd.f32 0.0, %v1239
      %v1241 = vpop.f32.mrb[0].mxu0
      %1242 = vmatprep.mubr.f32.mxu0 0.0
      %1243 = vmatmul.mubr.f32.gmra.mrb[0].mxu0 %v1098
      %v1244 = vpop.f32.mrb[0].mxu0
      %v1245 = vadd.f32 0.0, %v1244
      %v1246 = vpop.f32.mrb[0].mxu0
      %1247 = vdwg.mxu0
      %v1248 = vadd.f32 %v1013, %v1170
      %v1249 = vadd.f32 %v1018, %v1175
      %v1250 = vadd.f32 %v1023, %v1180
      %v1251 = vadd.f32 %v1028, %v1185
      %v1252 = vadd.f32 %v1033, %v1190
      %v1253 = vadd.f32 %v1038, %v1195
      %v1254 = vadd.f32 %v1043, %v1200
      %v1255 = vadd.f32 %v1048, %v1205
      %v1256 = vadd.f32 %v1053, %v1210
      %v1257 = vadd.f32 %v1058, %v1215
      %v1258 = vadd.f32 %v1063, %v1220
      %v1259 = vadd.f32 %v1068, %v1225
      %v1260 = vadd.f32 %v1073, %v1230
      %v1261 = vadd.f32 %v1078, %v1235
      %v1262 = vadd.f32 %v1083, %v1240
      %v1263 = vadd.f32 %v1088, %v1245
      %v1264 = vld [vmem:[%s368] sm:$0x1]
      %v1266 = vlaneseq
      %v1267 = vshrl.u32 %v1266, 7
      %v1268 = vsub.s32 0, %v1267
      %v1269 = vrot.slane %v1264, %v1268
      %v1271 = vadd.f32 %v1248, %v1269
      %v1272 = vadd.f32 %v1249, %v1269
      %v1273 = vadd.f32 %v1250, %v1269
      %v1274 = vadd.f32 %v1251, %v1269
      %v1275 = vadd.f32 %v1252, %v1269
      %v1276 = vadd.f32 %v1253, %v1269
      %v1277 = vadd.f32 %v1254, %v1269
      %v1278 = vadd.f32 %v1255, %v1269
      %v1279 = vadd.f32 %v1256, %v1269
      %v1280 = vadd.f32 %v1257, %v1269
      %v1281 = vadd.f32 %v1258, %v1269
      %v1282 = vadd.f32 %v1259, %v1269
      %v1283 = vadd.f32 %v1260, %v1269
      %v1284 = vadd.f32 %v1261, %v1269
      %v1285 = vadd.f32 %v1262, %v1269
      %v1286 = vadd.f32 %v1263, %v1269
      %v1287 = vmax.f32 %v1271, 0.0
      %v1288 = vmax.f32 %v1272, 0.0
      %v1289 = vmax.f32 %v1273, 0.0
      %v1290 = vmax.f32 %v1274, 0.0
      %v1291 = vmax.f32 %v1275, 0.0
      %v1292 = vmax.f32 %v1276, 0.0
      %v1293 = vmax.f32 %v1277, 0.0
      %v1294 = vmax.f32 %v1278, 0.0
      %v1295 = vmax.f32 %v1279, 0.0
      %v1296 = vmax.f32 %v1280, 0.0
      %v1297 = vmax.f32 %v1281, 0.0
      %v1298 = vmax.f32 %v1282, 0.0
      %v1299 = vmax.f32 %v1283, 0.0
      %v1300 = vmax.f32 %v1284, 0.0
      %v1301 = vmax.f32 %v1285, 0.0
      %v1302 = vmax.f32 %v1286, 0.0
      %1303 = vst.msk [vmem:[%s381] sm:$0xff] %vm713, %v1287
      %1304 = vst.msk [vmem:[%s381 + $0x8] sm:$0xff] %vm713, %v1288
      %1305 = vst.msk [vmem:[%s381 + $0x10] sm:$0xff] %vm713, %v1289
      %1306 = vst.msk [vmem:[%s381 + $0x18] sm:$0xff] %vm713, %v1290
      %1307 = vst.msk [vmem:[%s381 + $0x20] sm:$0xff] %vm713, %v1291
      %1308 = vst.msk [vmem:[%s381 + $0x28] sm:$0xff] %vm713, %v1292
      %1309 = vst.msk [vmem:[%s381 + $0x30] sm:$0xff] %vm713, %v1293
      %1310 = vst.msk [vmem:[%s381 + $0x38] sm:$0xff] %vm713, %v1294
      %1311 = vst.msk [vmem:[%s381 + $0x40] sm:$0xff] %vm713, %v1295
      %1312 = vst.msk [vmem:[%s381 + $0x48] sm:$0xff] %vm713, %v1296
      %1313 = vst.msk [vmem:[%s381 + $0x50] sm:$0xff] %vm713, %v1297
      %1314 = vst.msk [vmem:[%s381 + $0x58] sm:$0xff] %vm713, %v1298
      %1315 = vst.msk [vmem:[%s381 + $0x60] sm:$0xff] %vm713, %v1299
      %1316 = vst.msk [vmem:[%s381 + $0x68] sm:$0xff] %vm713, %v1300
      %1317 = vst.msk [vmem:[%s381 + $0x70] sm:$0xff] %vm713, %v1301
      %1318 = vst.msk [vmem:[%s381 + $0x78] sm:$0xff] %vm713, %v1302
      %s1319 = smul.u32 8, %s23
      %p1320 = scmp.lt.s32.totalorder %s22, 1
      %s1321 = scalar_select %p1320, %s22, 1
      %p1322 = scmp.lt.s32.totalorder %s1319, 15
      %s1323 = scalar_select %p1322, %s1319, 15
      %p1324 = scmp.lt.s32.totalorder %s21, 0
      %s1325 = scalar_select %p1324, %s21, 0
      %s1326 = smul.addr %s1323, 2
      %s1327 = sadd.s32 %s1325, %s1326
      %s1328 = smul.addr %s1321, 32
      %s1329 = sadd.s32 %s1327, %s1328
      %s1330 = smul.addr %s1329, 8
      %s1331 = scalar_lea.vmem %s5, %s1330
      // Predicated region
      $region41: #{tpu_custom_call.1} parent=39 // pred_check
        %p1332 = pneg %p193
      $region42: #{tpu_custom_call.1} parent=39 // pred_check_branch
        %1334 = sbr.rel (%p1332) target = $region44
      $region43: #{tpu_custom_call.1} parent=39 // pred_region
        %s1335 = smul.u32 8, %s23
      $region44: #{tpu_custom_call.1} parent=39 // pred_fallthru
        _
    $region40: #{tpu_custom_call.1} parent=5 // pred_fallthru
      _
    %p1336 = scmp.le.s32.totalorder 2, %s11
    // Predicated region
    $region45: #{tpu_custom_call.1} parent=5 // pred_check
      %p1337 = pneg %p1336
    $region46: #{tpu_custom_call.1} parent=5 // pred_check_branch
      %1339 = sbr.rel (%p1337) target = $region48
    $region47: #{tpu_custom_call.1} parent=5 // pred_region
      %s1340 = ssub.s32 %s11, 2
      // Predicated region
      $region49: #{tpu_custom_call.1} parent=47 // pred_check
        %p1341 = pneg %p199
      $region50: #{tpu_custom_call.1} parent=47 // pred_check_branch
        %1343 = sbr.rel (%p1341) target = $region52
      $region51: #{tpu_custom_call.1} parent=47 // pred_region
        %s1344 = smul.u32 8, %s26
        %p1345 = scmp.lt.s32.totalorder %s25, 1
        %s1346 = scalar_select %p1345, %s25, 1
        %p1347 = scmp.lt.s32.totalorder %s1344, 15
        %s1348 = scalar_select %p1347, %s1344, 15
        %p1349 = scmp.lt.s32.totalorder %s24, 0
        %s1350 = scalar_select %p1349, %s24, 0
        %s1351 = smul.addr %s1348, 2
        %s1352 = sadd.s32 %s1350, %s1351
        %s1353 = smul.addr %s1346, 32
        %s1354 = sadd.s32 %s1352, %s1353
        %s1355 = smul.addr %s1354, 8
        %s1356 = scalar_lea.vmem %s5, %s1355
      $region52: #{tpu_custom_call.1} parent=47 // pred_fallthru
        _
    $region48: #{tpu_custom_call.1} parent=5 // pred_fallthru
      _
  $region6: #{tpu_custom_call.1} parent=0 // loop_footer
    %s15 = sadd.s32 1, %s11
  $region7: #{tpu_custom_call.1} parent=0 // loop_footer_branch
    %10 = sbr.rel target = $region3
  $region8: #{tpu_custom_call.1} parent=0 // loop_exit
    _

</llo_original>
